<compile_context>
chip_gen: v7x
topology: tpu7x:2x2x1
jax: 0.10.0
libtpu: 0.0.40
codegen_flags: <defaults>
</compile_context>

<pallas_src>
import functools

import jax
import jax.numpy as jnp
from jax.experimental import pallas as pl
from jax.experimental.pallas import tpu as pltpu


def _precondition_applier_kernel(
    x_ref, ctx_ref, ec_ref,
    w1x_ref, w1c_ref, b1_ref,
    w2e_ls_ref, w2e_sh_ref, w2h_ls_ref, w2h_sh_ref, b2_ls_ref, b2_sh_ref,
    z_ref, ldj_ref,
    *, eup_dtype,
):
    # Activations arrive in their HBM dtype (f32 in the tests); cast to the MXU compute
    # dtype in-kernel (VPU cast, no extra HBM pass in the wrapper).
    cd = w1x_ref.dtype
    x = x_ref[...]                       # (TB, D), input dtype
    x_mm = x.astype(cd)
    c_mm = ctx_ref[...].astype(cd)       # (TB, C)
    ec_mm = ec_ref[...].astype(cd)       # (TB, E)

    # ---- pre_conditioner: tanh(concat(x, context) @ W1 + b1)  (concat folded) ----
    pre = (
        jnp.dot(x_mm, w1x_ref[...], preferred_element_type=jnp.float32)
        + jnp.dot(c_mm, w1c_ref[...], preferred_element_type=jnp.float32)
        + b1_ref[...]                                        # f32 bias, f32 accumulate
    )                                                        # (TB, H) f32
    h = jnp.tanh(pre.astype(eup_dtype))                      # EUP tanh (bf16 on v6e/v7x)
    h_mm = h.astype(w2h_ls_ref.dtype)                        # MXU compute dtype

    # ---- transform params from concat(extra_context, h) @ W2 + b2; W2/b2 column-split
    #      into (log_scale, shift) halves so both outputs are lane-0 aligned ----
    log_scale = (
        jnp.dot(ec_mm, w2e_ls_ref[...], preferred_element_type=jnp.float32)
        + jnp.dot(h_mm, w2h_ls_ref[...], preferred_element_type=jnp.float32)
        + b2_ls_ref[...]
    )                                                        # (TB, D) f32
    shift = (
        jnp.dot(ec_mm, w2e_sh_ref[...], preferred_element_type=jnp.float32)
        + jnp.dot(h_mm, w2h_sh_ref[...], preferred_element_type=jnp.float32)
        + b2_sh_ref[...]
    )                                                        # (TB, D) f32

    # ---- conditional affine transform: exp on the EUP, affine accumulate in f32 ----
    scale = jnp.exp(log_scale.astype(eup_dtype)).astype(jnp.float32)
    z_ref[...] = (x.astype(jnp.float32) * scale + shift).astype(z_ref.dtype)
    ldj_ref[...] = jnp.sum(log_scale, axis=-1, keepdims=True)   # (TB, 1) f32


def _round_up(a, m):
    return ((a + m - 1) // m) * m


def precondition_applier_forward(
    x, context, extra_context, params, *,
    block_b: int = 2048,            # batch tile cap; actual tile derived below
    compute_dtype=jnp.bfloat16,     # MXU input dtype; accumulation stays f32
    eup_dtype=None,                 # tanh/exp dtype; default = compute_dtype.
                                    # Pass jnp.float32 on v5e (no bf16 EUP) or for tight ldj.
    out_dtype=None,                 # z dtype; default = compute_dtype. ldj is always f32.
):
    """Fused pre_conditioner + conditional-affine transform.

    Returns (z, ldj) with z: (B, D) out_dtype, ldj: (B,) float32.
    """
    B, D = x.shape
    C = context.shape[-1]
    E = extra_context.shape[-1]
    w1x, w1c, b1, w2e, w2h, b2 = params
    H = w1x.shape[-1]

    cd = jnp.dtype(compute_dtype)
    eup = cd if eup_dtype is None else jnp.dtype(eup_dtype)
    z_dtype = cd if out_dtype is None else jnp.dtype(out_dtype)

    # Column-split second-layer weights/bias into log_scale / shift halves (wrapper-side,
    # KB-scale) so the kernel never slices a matmul output mid-vreg. Weights go to the MXU
    # compute dtype; biases stay f32 (added after the f32 accumulate, casting saves nothing).
    w2e_ls, w2e_sh = w2e[:, :D].astype(cd), w2e[:, D:].astype(cd)
    w2h_ls, w2h_sh = w2h[:, :D].astype(cd), w2h[:, D:].astype(cd)
    b2_ls, b2_sh = b2[:, :D], b2[:, D:]
    w1x_c, w1c_c = w1x.astype(cd), w1c.astype(cd)

    isz = lambda dt: jnp.dtype(dt).itemsize

    # ---- batch tile: multiple of 16 (bf16 sublane packing; also satisfies f32's 8),
    #      capped by (a) block_b, (b) a VMEM budget for the double-buffered activation +
    #      output blocks, (c) ceil(B/2) so the grid keeps >=2 steps for v7x's 2 TCs. ----
    block_b = max(16, (block_b // 16) * 16)
    bytes_per_row = (isz(x.dtype) * D + isz(context.dtype) * C + isz(extra_context.dtype) * E
                     + isz(z_dtype) * D + 4)                       # x, ctx, ec, z, ldj
    vmem_budget = 24 * 1024 * 1024                                 # act/out double-buffers
    tb_vmem_cap = max(16, (vmem_budget // (2 * bytes_per_row)) // 16 * 16)
    tb_half_b = _round_up(pl.cdiv(B, 2), 16)                       # >=2 grid steps if B > 16
    tb = max(16, min(block_b, tb_vmem_cap, tb_half_b))
    grid = (pl.cdiv(B, tb),)   # ragged last block: OOB reads are garbage rows, stores masked

    # Derive the scoped VMEM limit from the real footprint (+ headroom), capped well under
    # v7x's 64 MiB physical VMEM.
    io_block_bytes = tb * bytes_per_row
    weight_bytes = (isz(cd) * (D * H + C * H + 2 * (E * D + H * D)) + 4 * (H + 2 * D))
    intermediate_bytes = 4 * tb * (H + 4 * D)                      # h, log_scale, shift, scale
    vmem_limit = int(min(
        48 * 1024 * 1024,
        2 * io_block_bytes + 2 * weight_bytes + intermediate_bytes + 16 * 1024 * 1024,
    ))

    # Activation/output blocks walk the batch; weights/biases are resident (constant map).
    row_spec = lambda ncols: pl.BlockSpec((tb, ncols), lambda i: (i, 0))
    resident = lambda shp: pl.BlockSpec(shp, lambda i: (0, 0))

    kernel = functools.partial(_precondition_applier_kernel, eup_dtype=eup)

    z, ldj = pl.pallas_call(
        kernel,
        out_shape=(
            jax.ShapeDtypeStruct((B, D), z_dtype),
            jax.ShapeDtypeStruct((B, 1), jnp.float32),
        ),
        grid=grid,
        in_specs=[
            row_spec(D),            # x             (HBM dtype, cast in-kernel)
            row_spec(C),            # context
            row_spec(E),            # extra_context
            resident((D, H)),       # w1x  (compute dtype)
            resident((C, H)),       # w1c
            resident((1, H)),       # b1   (f32)
            resident((E, D)),       # w2e  (log_scale half)
            resident((E, D)),       # w2e  (shift half)
            resident((H, D)),       # w2h  (log_scale half)
            resident((H, D)),       # w2h  (shift half)
            resident((1, D)),       # b2   (log_scale half, f32)
            resident((1, D)),       # b2   (shift half, f32)
        ],
        out_specs=(
            row_spec(D),                                   # z
            pl.BlockSpec((tb, 1), lambda i: (i, 0)),       # ldj
        ),
        compiler_params=pltpu.CompilerParams(
            dimension_semantics=("parallel",),             # megacore-shard batch on v7x
            vmem_limit_bytes=vmem_limit,
        ),
    )(
        x, context, extra_context,
        w1x_c, w1c_c, b1,
        w2e_ls, w2e_sh, w2h_ls, w2h_sh, b2_ls, b2_sh,
    )

    return z, ldj[:, 0]


# ---------------------------------------------------------------------------
# Reference
# ---------------------------------------------------------------------------
def _reference_f32(x, context, extra_context, params):
    """Exact forward semantics of the module in f32."""
    w1x, w1c, b1, w2e, w2h, b2 = params
    h = jnp.tanh(x @ w1x + context @ w1c + b1)
    p = extra_context @ w2e + h @ w2h + b2
    d = x.shape[-1]
    log_scale, shift = p[:, :d], p[:, d:]
    z = x * jnp.exp(log_scale) + shift
    ldj = jnp.sum(log_scale, axis=-1)
    return z, ldj


if __name__ == "__main__":
    # Small, deterministic shapes; B=20 exercises the >=2-step grid plus the ragged
    # (masked) last batch block without any wrapper-side padding.
    B, D, C, H, E = 20, 32, 16, 24, 8

    key = jax.random.PRNGKey(0)
    keys = jax.random.split(key, 9)

    x = jax.random.normal(keys[0], (B, D), dtype=jnp.float32)
    context = jax.random.normal(keys[1], (B, C), dtype=jnp.float32)
    extra_context = jax.random.normal(keys[2], (B, E), dtype=jnp.float32)

    # Deterministic synthetic parameters (no checkpoint loading).
    w1x = 0.1 * jax.random.normal(keys[3], (D, H), dtype=jnp.float32)
    w1c = 0.1 * jax.random.normal(keys[4], (C, H), dtype=jnp.float32)
    b1 = 0.01 * jax.random.normal(keys[5], (1, H), dtype=jnp.float32)
    w2e = 0.1 * jax.random.normal(keys[6], (E, 2 * D), dtype=jnp.float32)
    w2h = 0.1 * jax.random.normal(keys[7], (H, 2 * D), dtype=jnp.float32)
    b2 = 0.01 * jax.random.normal(keys[8], (1, 2 * D), dtype=jnp.float32)
    params = (w1x, w1c, b1, w2e, w2h, b2)

    z_ref, ldj_ref = _reference_f32(x, context, extra_context, params)

    # 1) f32 compute path: exact forward semantics of the module (tight check).
    z32, ldj32 = precondition_applier_forward(
        x, context, extra_context, params,
        compute_dtype=jnp.float32, out_dtype=jnp.float32)
    z32 = jax.block_until_ready(z32)
    ldj32 = jax.block_until_ready(ldj32)
    assert z32.shape == (B, D) and ldj32.shape == (B,)
    assert z32.dtype == jnp.float32
    assert jnp.allclose(z32, z_ref, atol=2e-5, rtol=2e-5)
    assert jnp.allclose(ldj32, ldj_ref, atol=2e-5, rtol=2e-5)

    # 2) Default performance configuration: bf16 MXU inputs, bf16 EUP transcendentals,
    #    bf16 z output, f32 accumulation / biases / ldj. Loose semantic check vs f32 ref.
    zbf, ldjbf = precondition_applier_forward(x, context, extra_context, params)
    zbf = jax.block_until_ready(zbf)
    ldjbf = jax.block_until_ready(ldjbf)
    assert zbf.shape == (B, D) and ldjbf.shape == (B,)
    assert zbf.dtype == jnp.bfloat16 and ldjbf.dtype == jnp.float32
    assert jnp.allclose(zbf.astype(jnp.float32), z_ref, atol=0.3, rtol=0.0)
    assert jnp.allclose(ldjbf, ldj_ref, atol=0.3, rtol=0.0)

    print("KERNEL_OK")
</pallas_src>

<mosaic_0001>
module attributes {stable_mosaic.version = 11 : i64} {
  func.func @_precondition_applier_kernel(%arg0: i32, %arg1: memref<16x32xf32, #tpu.memory_space<vmem>>, %arg2: memref<16x16xf32, #tpu.memory_space<vmem>>, %arg3: memref<16x8xf32, #tpu.memory_space<vmem>>, %arg4: memref<32x24xf32, #tpu.memory_space<vmem>>, %arg5: memref<16x24xf32, #tpu.memory_space<vmem>>, %arg6: memref<1x24xf32, #tpu.memory_space<vmem>>, %arg7: memref<8x32xf32, #tpu.memory_space<vmem>>, %arg8: memref<8x32xf32, #tpu.memory_space<vmem>>, %arg9: memref<24x32xf32, #tpu.memory_space<vmem>>, %arg10: memref<24x32xf32, #tpu.memory_space<vmem>>, %arg11: memref<1x32xf32, #tpu.memory_space<vmem>>, %arg12: memref<1x32xf32, #tpu.memory_space<vmem>>, %arg13: memref<16x32xf32, #tpu.memory_space<vmem>>, %arg14: memref<16x1xf32, #tpu.memory_space<vmem>>) attributes {dimension_semantics = [#tpu.dimension_semantics<parallel>], iteration_bounds = array<i64: 2>, scalar_prefetch = 0 : i64, scratch_operands = 0 : i64, tpu.core_type = #tpu.core_type<tc>, window_params = [{transform_indices = @transform_0, window_bounds = array<i64: 16, 32>}, {transform_indices = @transform_1, window_bounds = array<i64: 16, 16>}, {transform_indices = @transform_2, window_bounds = array<i64: 16, 8>}, {pipeline_mode = #tpu.pipeline_mode<synchronous>, transform_indices = @transform_3, window_bounds = array<i64: 32, 24>}, {pipeline_mode = #tpu.pipeline_mode<synchronous>, transform_indices = @transform_4, window_bounds = array<i64: 16, 24>}, {pipeline_mode = #tpu.pipeline_mode<synchronous>, transform_indices = @transform_5, window_bounds = array<i64: 1, 24>}, {pipeline_mode = #tpu.pipeline_mode<synchronous>, transform_indices = @transform_6, window_bounds = array<i64: 8, 32>}, {pipeline_mode = #tpu.pipeline_mode<synchronous>, transform_indices = @transform_7, window_bounds = array<i64: 8, 32>}, {pipeline_mode = #tpu.pipeline_mode<synchronous>, transform_indices = @transform_8, window_bounds = array<i64: 24, 32>}, {pipeline_mode = #tpu.pipeline_mode<synchronous>, transform_indices = @transform_9, window_bounds = array<i64: 24, 32>}, {pipeline_mode = #tpu.pipeline_mode<synchronous>, transform_indices = @transform_10, window_bounds = array<i64: 1, 32>}, {pipeline_mode = #tpu.pipeline_mode<synchronous>, transform_indices = @transform_11, window_bounds = array<i64: 1, 32>}, {transform_indices = @transform_12, window_bounds = array<i64: 16, 32>}, {transform_indices = @transform_13, window_bounds = array<i64: 16, 1>}]} {
    %c0 = arith.constant 0 : index
    %c0_0 = arith.constant 0 : index
    %0 = vector.load %arg1[%c0, %c0_0] : memref<16x32xf32, #tpu.memory_space<vmem>>, vector<16x32xf32>
    %c0_1 = arith.constant 0 : index
    %c0_2 = arith.constant 0 : index
    %1 = vector.load %arg2[%c0_1, %c0_2] : memref<16x16xf32, #tpu.memory_space<vmem>>, vector<16x16xf32>
    %c0_3 = arith.constant 0 : index
    %c0_4 = arith.constant 0 : index
    %2 = vector.load %arg3[%c0_3, %c0_4] : memref<16x8xf32, #tpu.memory_space<vmem>>, vector<16x8xf32>
    %c0_5 = arith.constant 0 : index
    %c0_6 = arith.constant 0 : index
    %3 = vector.load %arg4[%c0_5, %c0_6] : memref<32x24xf32, #tpu.memory_space<vmem>>, vector<32x24xf32>
    %cst = arith.constant dense<0.000000e+00> : vector<16x24xf32>
    %4 = tpu.matmul %0, %3, %cst {dimension_numbers = #tpu.dot_dimension_numbers<[1], [0], [0], [1], [0, 0, 1, 1], [], []>} : vector<16x32xf32>, vector<32x24xf32>, vector<16x24xf32> -> vector<16x24xf32>
    %c0_7 = arith.constant 0 : index
    %c0_8 = arith.constant 0 : index
    %5 = vector.load %arg5[%c0_7, %c0_8] : memref<16x24xf32, #tpu.memory_space<vmem>>, vector<16x24xf32>
    %cst_9 = arith.constant dense<0.000000e+00> : vector<16x24xf32>
    %6 = tpu.matmul %1, %5, %cst_9 {dimension_numbers = #tpu.dot_dimension_numbers<[1], [0], [0], [1], [0, 0, 1, 1], [], []>} : vector<16x16xf32>, vector<16x24xf32>, vector<16x24xf32> -> vector<16x24xf32>
    %7 = arith.addf %4, %6 : vector<16x24xf32>
    %c0_10 = arith.constant 0 : index
    %c0_11 = arith.constant 0 : index
    %8 = vector.load %arg6[%c0_10, %c0_11] : memref<1x24xf32, #tpu.memory_space<vmem>>, vector<1x24xf32>
    %9 = vector.broadcast %8 : vector<1x24xf32> to vector<16x24xf32>
    %10 = arith.addf %7, %9 : vector<16x24xf32>
    %11 = math.tanh %10 : vector<16x24xf32>
    %c0_12 = arith.constant 0 : index
    %c0_13 = arith.constant 0 : index
    %12 = vector.load %arg7[%c0_12, %c0_13] : memref<8x32xf32, #tpu.memory_space<vmem>>, vector<8x32xf32>
    %cst_14 = arith.constant dense<0.000000e+00> : vector<16x32xf32>
    %13 = tpu.matmul %2, %12, %cst_14 {dimension_numbers = #tpu.dot_dimension_numbers<[1], [0], [0], [1], [0, 0, 1, 1], [], []>} : vector<16x8xf32>, vector<8x32xf32>, vector<16x32xf32> -> vector<16x32xf32>
    %c0_15 = arith.constant 0 : index
    %c0_16 = arith.constant 0 : index
    %14 = vector.load %arg9[%c0_15, %c0_16] : memref<24x32xf32, #tpu.memory_space<vmem>>, vector<24x32xf32>
    %cst_17 = arith.constant dense<0.000000e+00> : vector<16x32xf32>
    %15 = tpu.matmul %11, %14, %cst_17 {dimension_numbers = #tpu.dot_dimension_numbers<[1], [0], [0], [1], [0, 0, 1, 1], [], []>} : vector<16x24xf32>, vector<24x32xf32>, vector<16x32xf32> -> vector<16x32xf32>
    %16 = arith.addf %13, %15 : vector<16x32xf32>
    %c0_18 = arith.constant 0 : index
    %c0_19 = arith.constant 0 : index
    %17 = vector.load %arg11[%c0_18, %c0_19] : memref<1x32xf32, #tpu.memory_space<vmem>>, vector<1x32xf32>
    %18 = vector.broadcast %17 : vector<1x32xf32> to vector<16x32xf32>
    %19 = arith.addf %16, %18 : vector<16x32xf32>
    %c0_20 = arith.constant 0 : index
    %c0_21 = arith.constant 0 : index
    %20 = vector.load %arg8[%c0_20, %c0_21] : memref<8x32xf32, #tpu.memory_space<vmem>>, vector<8x32xf32>
    %cst_22 = arith.constant dense<0.000000e+00> : vector<16x32xf32>
    %21 = tpu.matmul %2, %20, %cst_22 {dimension_numbers = #tpu.dot_dimension_numbers<[1], [0], [0], [1], [0, 0, 1, 1], [], []>} : vector<16x8xf32>, vector<8x32xf32>, vector<16x32xf32> -> vector<16x32xf32>
    %c0_23 = arith.constant 0 : index
    %c0_24 = arith.constant 0 : index
    %22 = vector.load %arg10[%c0_23, %c0_24] : memref<24x32xf32, #tpu.memory_space<vmem>>, vector<24x32xf32>
    %cst_25 = arith.constant dense<0.000000e+00> : vector<16x32xf32>
    %23 = tpu.matmul %11, %22, %cst_25 {dimension_numbers = #tpu.dot_dimension_numbers<[1], [0], [0], [1], [0, 0, 1, 1], [], []>} : vector<16x24xf32>, vector<24x32xf32>, vector<16x32xf32> -> vector<16x32xf32>
    %24 = arith.addf %21, %23 : vector<16x32xf32>
    %c0_26 = arith.constant 0 : index
    %c0_27 = arith.constant 0 : index
    %25 = vector.load %arg12[%c0_26, %c0_27] : memref<1x32xf32, #tpu.memory_space<vmem>>, vector<1x32xf32>
    %26 = vector.broadcast %25 : vector<1x32xf32> to vector<16x32xf32>
    %27 = arith.addf %24, %26 : vector<16x32xf32>
    %28 = math.exp %19 : vector<16x32xf32>
    %29 = arith.mulf %0, %28 : vector<16x32xf32>
    %30 = arith.addf %29, %27 : vector<16x32xf32>
    %c0_28 = arith.constant 0 : index
    %c0_29 = arith.constant 0 : index
    %31 = vector.load %arg13[%c0_28, %c0_29] : memref<16x32xf32, #tpu.memory_space<vmem>>, vector<16x32xf32>
    tpu.vector_store %arg13[%c0_28, %c0_29], %30 {strides = array<i32>} : memref<16x32xf32, #tpu.memory_space<vmem>>, vector<16x32xf32>,
    %cst_30 = arith.constant dense<0.000000e+00> : vector<16xf32>
    %32 = vector.multi_reduction <add>, %19, %cst_30 [1] : vector<16x32xf32> to vector<16xf32>
    %33 = vector.shape_cast %32 : vector<16xf32> to vector<16x1xf32>
    %c0_31 = arith.constant 0 : index
    %c0_32 = arith.constant 0 : index
    %34 = vector.load %arg14[%c0_31, %c0_32] : memref<16x1xf32, #tpu.memory_space<vmem>>, vector<16x1xf32>
    tpu.vector_store %arg14[%c0_31, %c0_32], %33 {strides = array<i32>} : memref<16x1xf32, #tpu.memory_space<vmem>>, vector<16x1xf32>,
    return
  }
  func.func @transform_0(%arg0: i32) -> (i32, i32) {
    %c0_i32 = arith.constant 0 : i32
    %c0_i32_0 = arith.constant 0 : i32
    return %arg0, %c0_i32 : i32, i32
  }
  func.func @transform_1(%arg0: i32) -> (i32, i32) {
    %c0_i32 = arith.constant 0 : i32
    %c0_i32_0 = arith.constant 0 : i32
    return %arg0, %c0_i32 : i32, i32
  }
  func.func @transform_2(%arg0: i32) -> (i32, i32) {
    %c0_i32 = arith.constant 0 : i32
    %c0_i32_0 = arith.constant 0 : i32
    return %arg0, %c0_i32 : i32, i32
  }
  func.func @transform_3(%arg0: i32) -> (i32, i32) {
    %c0_i32 = arith.constant 0 : i32
    %c0_i32_0 = arith.constant 0 : i32
    %c0_i32_1 = arith.constant 0 : i32
    return %c0_i32, %c0_i32_0 : i32, i32
  }
  func.func @transform_4(%arg0: i32) -> (i32, i32) {
    %c0_i32 = arith.constant 0 : i32
    %c0_i32_0 = arith.constant 0 : i32
    %c0_i32_1 = arith.constant 0 : i32
    return %c0_i32, %c0_i32_0 : i32, i32
  }
  func.func @transform_5(%arg0: i32) -> (i32, i32) {
    %c0_i32 = arith.constant 0 : i32
    %c0_i32_0 = arith.constant 0 : i32
    %c0_i32_1 = arith.constant 0 : i32
    return %c0_i32, %c0_i32_0 : i32, i32
  }
  func.func @transform_6(%arg0: i32) -> (i32, i32) {
    %c0_i32 = arith.constant 0 : i32
    %c0_i32_0 = arith.constant 0 : i32
    %c0_i32_1 = arith.constant 0 : i32
    return %c0_i32, %c0_i32_0 : i32, i32
  }
  func.func @transform_7(%arg0: i32) -> (i32, i32) {
    %c0_i32 = arith.constant 0 : i32
    %c0_i32_0 = arith.constant 0 : i32
    %c0_i32_1 = arith.constant 0 : i32
    return %c0_i32, %c0_i32_0 : i32, i32
  }
  func.func @transform_8(%arg0: i32) -> (i32, i32) {
    %c0_i32 = arith.constant 0 : i32
    %c0_i32_0 = arith.constant 0 : i32
    %c0_i32_1 = arith.constant 0 : i32
    return %c0_i32, %c0_i32_0 : i32, i32
  }
  func.func @transform_9(%arg0: i32) -> (i32, i32) {
    %c0_i32 = arith.constant 0 : i32
    %c0_i32_0 = arith.constant 0 : i32
    %c0_i32_1 = arith.constant 0 : i32
    return %c0_i32, %c0_i32_0 : i32, i32
  }
  func.func @transform_10(%arg0: i32) -> (i32, i32) {
    %c0_i32 = arith.constant 0 : i32
    %c0_i32_0 = arith.constant 0 : i32
    %c0_i32_1 = arith.constant 0 : i32
    return %c0_i32, %c0_i32_0 : i32, i32
  }
  func.func @transform_11(%arg0: i32) -> (i32, i32) {
    %c0_i32 = arith.constant 0 : i32
    %c0_i32_0 = arith.constant 0 : i32
    %c0_i32_1 = arith.constant 0 : i32
    return %c0_i32, %c0_i32_0 : i32, i32
  }
  func.func @transform_12(%arg0: i32) -> (i32, i32) {
    %c0_i32 = arith.constant 0 : i32
    %c0_i32_0 = arith.constant 0 : i32
    return %arg0, %c0_i32 : i32, i32
  }
  func.func @transform_13(%arg0: i32) -> (i32, i32) {
    %c0_i32 = arith.constant 0 : i32
    %c0_i32_0 = arith.constant 0 : i32
    return %arg0, %c0_i32 : i32, i32
  }
}

</mosaic_0001>

<llo_original>
// kernel: tpu_custom_call.1
$region0: #{tpu_custom_call.1}
  #allocation0 [shape = 'u32[]', space=smem, size = 0x4, offset = 0x4, fixed_abs, tag = 'smem constant byte address 0x4 - core index']
  #allocation1 [shape = 'u32[144,128]{1,0:T(1,128)}', space=vmem, size = 0x12000, scoped, tag = 'internal scratch']
  %s0 = inlined_call_operand.vmem [shape: f32[20,32], index: 0, kind: input, shape index: {}]
  %s1 = inlined_call_operand.vmem [shape: f32[20,16], index: 1, kind: input, shape index: {}]
  %s2 = inlined_call_operand.vmem [shape: f32[20,8], index: 2, kind: input, shape index: {}]
  %s3 = inlined_call_operand.vmem [shape: f32[32,24], index: 3, kind: input, shape index: {}]
  %s4 = inlined_call_operand.vmem [shape: f32[16,24], index: 4, kind: input, shape index: {}]
  %s5 = inlined_call_operand.vmem [shape: f32[1,24], index: 5, kind: input, shape index: {}]
  %s6 = inlined_call_operand.vmem [shape: f32[8,32], index: 6, kind: input, shape index: {}]
  %s7 = inlined_call_operand.vmem [shape: f32[8,32], index: 7, kind: input, shape index: {}]
  %s8 = inlined_call_operand.vmem [shape: f32[24,32], index: 8, kind: input, shape index: {}]
  %s9 = inlined_call_operand.vmem [shape: f32[24,32], index: 9, kind: input, shape index: {}]
  %s10 = inlined_call_operand.vmem [shape: f32[1,32], index: 10, kind: input, shape index: {}]
  %s11 = inlined_call_operand.vmem [shape: f32[1,32], index: 11, kind: input, shape index: {}]
  %s12 = inlined_call_operand.hbm [shape: f32[20,32], index: 12, kind: output, shape index: {0}]
  %s13 = inlined_call_operand.vmem [shape: f32[20,1], index: 13, kind: output, shape index: {1}]
  %14 = xla_tuple %s12, %s13
  %s15 = sld [smem:[#allocation0]]
  $region137: #{tpu_custom_call.1} parent=0
    _
  %s17 = ssub.s32 1, %s15
  %s18 = scalar_select 0, %s17, %s15
  $region1: #{tpu_custom_call.1} parent=0
    #allocation2 [shape = 'u8[16384]{0}', space=vmem, size = 0x4000, scoped, tag = 'output window, operand 0']
    #allocation3 [shape = 's32[2]{0}', space=sflag, size = 0x8, scoped, tag = 'scoped memory for tpu_custom_call.1']
    #allocation4 [shape = 'u8[16384]{0}', space=vmem, size = 0x4000, scoped, tag = 'output window, operand 1']
    %19 = vsyncpa [#allocation3], 0
    %s20 = scalar_lea.sflag [#allocation3], 1
    %21 = vsyncpa %s20, 0
    loop: start=0, step=1, limit=4
    $region2: #{tpu_custom_call.1} parent=1 // loop_pre_header
      _
    $region3: #{tpu_custom_call.1} parent=1 // loop_header
      %s23 = sphi 0, %s27
      %p24 = scmp.ge.s32.totalorder %s23, 4
      %s33 = sphi 0, %s35
      %s36 = sphi 0, %s33
      %s37 = sphi 0, %s36
      %s53 = sphi 0, %s37
      %s59 = sphi 0, %s61
      %s62 = sphi 0, %s59
      %s63 = sphi 0, %s62
      %s79 = sphi 0, %s63
      %s85 = sphi 0, %s87
      %s88 = sphi 0, %s85
      %s89 = sphi 0, %s88
      %s105 = sphi 0, %s89
      %s109 = sphi 0, %s109
      %s111 = sphi 0, %s109
      %s112 = sphi 0, %s111
      %s126 = sphi 0, %s112
      %s130 = sphi 0, %s130
      %s132 = sphi 0, %s130
      %s133 = sphi 0, %s132
      %s147 = sphi 0, %s133
      %s151 = sphi 0, %s151
      %s153 = sphi 0, %s151
      %s154 = sphi 0, %s153
      %s168 = sphi 0, %s154
      %s172 = sphi 0, %s172
      %s174 = sphi 0, %s172
      %s175 = sphi 0, %s174
      %s189 = sphi 0, %s175
      %s193 = sphi 0, %s193
      %s195 = sphi 0, %s193
      %s196 = sphi 0, %s195
      %s210 = sphi 0, %s196
      %s214 = sphi 0, %s214
      %s216 = sphi 0, %s214
      %s217 = sphi 0, %s216
      %s231 = sphi 0, %s217
      %s235 = sphi 0, %s235
      %s237 = sphi 0, %s235
      %s238 = sphi 0, %s237
      %s252 = sphi 0, %s238
      %s256 = sphi 0, %s256
      %s258 = sphi 0, %s256
      %s259 = sphi 0, %s258
      %s273 = sphi 0, %s259
      %s277 = sphi 0, %s277
      %s279 = sphi 0, %s277
      %s280 = sphi 0, %s279
      %s294 = sphi 0, %s280
      %s300 = sphi 0, %s302
      %s303 = sphi 0, %s300
      %s304 = sphi 0, %s303
      %s320 = sphi 0, %s304
      %s326 = sphi 0, %s328
      %s329 = sphi 0, %s326
      %s330 = sphi 0, %s329
      %s346 = sphi 0, %s330
    $region4: #{tpu_custom_call.1} parent=1 // loop_header_branch
      %26 = sbr.rel (%p24) target = $region8
    $region5: #{tpu_custom_call.1} parent=1 // loop_body
      %s28 = ssub.s32 %s23, 1
      %s29 = ssub.s32 %s23, 2
      %s30 = sadd.s32 %s23, 1
      %s31 = ssub.s32 %s23, %s30
      %p32 = scmp.eq.s32.totalorder %s31, 0
      %s34 = sadd.s32 %s33, 1
      %s35 = scalar_select %p32, %s33, %s34
      %p38 = pneg %p32
      %p39 = scmp.eq.s32.totalorder %s23, 1
      %p40 = por %p38, %p39
      %p41 = scmp.ne.s32.totalorder %s33, %s36
      %p42 = scmp.eq.s32.totalorder %s23, 0
      %p43 = por %p41, %p42
      %p44 = scmp.ne.s32.totalorder %s33, %s36
      %p45 = scmp.eq.s32.totalorder %s28, 1
      %p46 = por %p44, %p45
      %p47 = scmp.ne.s32.totalorder %s36, %s37
      %p48 = scmp.eq.s32.totalorder %s28, 0
      %p49 = por %p47, %p48
      %p50 = scmp.ne.s32.totalorder %s36, %s37
      %p51 = scmp.eq.s32.totalorder %s29, 1
      %p52 = por %p50, %p51
      %p54 = scmp.ne.s32.totalorder %s37, %s53
      %p55 = scmp.eq.s32.totalorder %s29, 0
      %p56 = por %p54, %p55
      %s57 = ssub.s32 %s23, %s30
      %p58 = scmp.eq.s32.totalorder %s57, 0
      %s60 = sadd.s32 %s59, 1
      %s61 = scalar_select %p58, %s59, %s60
      %p64 = pneg %p58
      %p65 = scmp.eq.s32.totalorder %s23, 1
      %p66 = por %p64, %p65
      %p67 = scmp.ne.s32.totalorder %s59, %s62
      %p68 = scmp.eq.s32.totalorder %s23, 0
      %p69 = por %p67, %p68
      %p70 = scmp.ne.s32.totalorder %s59, %s62
      %p71 = scmp.eq.s32.totalorder %s28, 1
      %p72 = por %p70, %p71
      %p73 = scmp.ne.s32.totalorder %s62, %s63
      %p74 = scmp.eq.s32.totalorder %s28, 0
      %p75 = por %p73, %p74
      %p76 = scmp.ne.s32.totalorder %s62, %s63
      %p77 = scmp.eq.s32.totalorder %s29, 1
      %p78 = por %p76, %p77
      %p80 = scmp.ne.s32.totalorder %s63, %s79
      %p81 = scmp.eq.s32.totalorder %s29, 0
      %p82 = por %p80, %p81
      %s83 = ssub.s32 %s23, %s30
      %p84 = scmp.eq.s32.totalorder %s83, 0
      %s86 = sadd.s32 %s85, 1
      %s87 = scalar_select %p84, %s85, %s86
      %p90 = pneg %p84
      %p91 = scmp.eq.s32.totalorder %s23, 1
      %p92 = por %p90, %p91
      %p93 = scmp.ne.s32.totalorder %s85, %s88
      %p94 = scmp.eq.s32.totalorder %s23, 0
      %p95 = por %p93, %p94
      %p96 = scmp.ne.s32.totalorder %s85, %s88
      %p97 = scmp.eq.s32.totalorder %s28, 1
      %p98 = por %p96, %p97
      %p99 = scmp.ne.s32.totalorder %s88, %s89
      %p100 = scmp.eq.s32.totalorder %s28, 0
      %p101 = por %p99, %p100
      %p102 = scmp.ne.s32.totalorder %s88, %s89
      %p103 = scmp.eq.s32.totalorder %s29, 1
      %p104 = por %p102, %p103
      %p106 = scmp.ne.s32.totalorder %s89, %s105
      %p107 = scmp.eq.s32.totalorder %s29, 0
      %p108 = por %p106, %p107
      %s110 = sadd.s32 %s109, 1
      %p113 = scmp.eq.s32.totalorder %s23, 1
      %p114 = scmp.ne.s32.totalorder %s109, %s111
      %p115 = scmp.eq.s32.totalorder %s23, 0
      %p116 = por %p114, %p115
      %p117 = scmp.ne.s32.totalorder %s109, %s111
      %p118 = scmp.eq.s32.totalorder %s28, 1
      %p119 = por %p117, %p118
      %p120 = scmp.ne.s32.totalorder %s111, %s112
      %p121 = scmp.eq.s32.totalorder %s28, 0
      %p122 = por %p120, %p121
      %p123 = scmp.ne.s32.totalorder %s111, %s112
      %p124 = scmp.eq.s32.totalorder %s29, 1
      %p125 = por %p123, %p124
      %p127 = scmp.ne.s32.totalorder %s112, %s126
      %p128 = scmp.eq.s32.totalorder %s29, 0
      %p129 = por %p127, %p128
      %s131 = sadd.s32 %s130, 1
      %p134 = scmp.eq.s32.totalorder %s23, 1
      %p135 = scmp.ne.s32.totalorder %s130, %s132
      %p136 = scmp.eq.s32.totalorder %s23, 0
      %p137 = por %p135, %p136
      %p138 = scmp.ne.s32.totalorder %s130, %s132
      %p139 = scmp.eq.s32.totalorder %s28, 1
      %p140 = por %p138, %p139
      %p141 = scmp.ne.s32.totalorder %s132, %s133
      %p142 = scmp.eq.s32.totalorder %s28, 0
      %p143 = por %p141, %p142
      %p144 = scmp.ne.s32.totalorder %s132, %s133
      %p145 = scmp.eq.s32.totalorder %s29, 1
      %p146 = por %p144, %p145
      %p148 = scmp.ne.s32.totalorder %s133, %s147
      %p149 = scmp.eq.s32.totalorder %s29, 0
      %p150 = por %p148, %p149
      %s152 = sadd.s32 %s151, 1
      %p155 = scmp.eq.s32.totalorder %s23, 1
      %p156 = scmp.ne.s32.totalorder %s151, %s153
      %p157 = scmp.eq.s32.totalorder %s23, 0
      %p158 = por %p156, %p157
      %p159 = scmp.ne.s32.totalorder %s151, %s153
      %p160 = scmp.eq.s32.totalorder %s28, 1
      %p161 = por %p159, %p160
      %p162 = scmp.ne.s32.totalorder %s153, %s154
      %p163 = scmp.eq.s32.totalorder %s28, 0
      %p164 = por %p162, %p163
      %p165 = scmp.ne.s32.totalorder %s153, %s154
      %p166 = scmp.eq.s32.totalorder %s29, 1
      %p167 = por %p165, %p166
      %p169 = scmp.ne.s32.totalorder %s154, %s168
      %p170 = scmp.eq.s32.totalorder %s29, 0
      %p171 = por %p169, %p170
      %s173 = sadd.s32 %s172, 1
      %p176 = scmp.eq.s32.totalorder %s23, 1
      %p177 = scmp.ne.s32.totalorder %s172, %s174
      %p178 = scmp.eq.s32.totalorder %s23, 0
      %p179 = por %p177, %p178
      %p180 = scmp.ne.s32.totalorder %s172, %s174
      %p181 = scmp.eq.s32.totalorder %s28, 1
      %p182 = por %p180, %p181
      %p183 = scmp.ne.s32.totalorder %s174, %s175
      %p184 = scmp.eq.s32.totalorder %s28, 0
      %p185 = por %p183, %p184
      %p186 = scmp.ne.s32.totalorder %s174, %s175
      %p187 = scmp.eq.s32.totalorder %s29, 1
      %p188 = por %p186, %p187
      %p190 = scmp.ne.s32.totalorder %s175, %s189
      %p191 = scmp.eq.s32.totalorder %s29, 0
      %p192 = por %p190, %p191
      %s194 = sadd.s32 %s193, 1
      %p197 = scmp.eq.s32.totalorder %s23, 1
      %p198 = scmp.ne.s32.totalorder %s193, %s195
      %p199 = scmp.eq.s32.totalorder %s23, 0
      %p200 = por %p198, %p199
      %p201 = scmp.ne.s32.totalorder %s193, %s195
      %p202 = scmp.eq.s32.totalorder %s28, 1
      %p203 = por %p201, %p202
      %p204 = scmp.ne.s32.totalorder %s195, %s196
      %p205 = scmp.eq.s32.totalorder %s28, 0
      %p206 = por %p204, %p205
      %p207 = scmp.ne.s32.totalorder %s195, %s196
      %p208 = scmp.eq.s32.totalorder %s29, 1
      %p209 = por %p207, %p208
      %p211 = scmp.ne.s32.totalorder %s196, %s210
      %p212 = scmp.eq.s32.totalorder %s29, 0
      %p213 = por %p211, %p212
      %s215 = sadd.s32 %s214, 1
      %p218 = scmp.eq.s32.totalorder %s23, 1
      %p219 = scmp.ne.s32.totalorder %s214, %s216
      %p220 = scmp.eq.s32.totalorder %s23, 0
      %p221 = por %p219, %p220
      %p222 = scmp.ne.s32.totalorder %s214, %s216
      %p223 = scmp.eq.s32.totalorder %s28, 1
      %p224 = por %p222, %p223
      %p225 = scmp.ne.s32.totalorder %s216, %s217
      %p226 = scmp.eq.s32.totalorder %s28, 0
      %p227 = por %p225, %p226
      %p228 = scmp.ne.s32.totalorder %s216, %s217
      %p229 = scmp.eq.s32.totalorder %s29, 1
      %p230 = por %p228, %p229
      %p232 = scmp.ne.s32.totalorder %s217, %s231
      %p233 = scmp.eq.s32.totalorder %s29, 0
      %p234 = por %p232, %p233
      %s236 = sadd.s32 %s235, 1
      %p239 = scmp.eq.s32.totalorder %s23, 1
      %p240 = scmp.ne.s32.totalorder %s235, %s237
      %p241 = scmp.eq.s32.totalorder %s23, 0
      %p242 = por %p240, %p241
      %p243 = scmp.ne.s32.totalorder %s235, %s237
      %p244 = scmp.eq.s32.totalorder %s28, 1
      %p245 = por %p243, %p244
      %p246 = scmp.ne.s32.totalorder %s237, %s238
      %p247 = scmp.eq.s32.totalorder %s28, 0
      %p248 = por %p246, %p247
      %p249 = scmp.ne.s32.totalorder %s237, %s238
      %p250 = scmp.eq.s32.totalorder %s29, 1
      %p251 = por %p249, %p250
      %p253 = scmp.ne.s32.totalorder %s238, %s252
      %p254 = scmp.eq.s32.totalorder %s29, 0
      %p255 = por %p253, %p254
      %s257 = sadd.s32 %s256, 1
      %p260 = scmp.eq.s32.totalorder %s23, 1
      %p261 = scmp.ne.s32.totalorder %s256, %s258
      %p262 = scmp.eq.s32.totalorder %s23, 0
      %p263 = por %p261, %p262
      %p264 = scmp.ne.s32.totalorder %s256, %s258
      %p265 = scmp.eq.s32.totalorder %s28, 1
      %p266 = por %p264, %p265
      %p267 = scmp.ne.s32.totalorder %s258, %s259
      %p268 = scmp.eq.s32.totalorder %s28, 0
      %p269 = por %p267, %p268
      %p270 = scmp.ne.s32.totalorder %s258, %s259
      %p271 = scmp.eq.s32.totalorder %s29, 1
      %p272 = por %p270, %p271
      %p274 = scmp.ne.s32.totalorder %s259, %s273
      %p275 = scmp.eq.s32.totalorder %s29, 0
      %p276 = por %p274, %p275
      %s278 = sadd.s32 %s277, 1
      %p281 = scmp.eq.s32.totalorder %s23, 1
      %p282 = scmp.ne.s32.totalorder %s277, %s279
      %p283 = scmp.eq.s32.totalorder %s23, 0
      %p284 = por %p282, %p283
      %p285 = scmp.ne.s32.totalorder %s277, %s279
      %p286 = scmp.eq.s32.totalorder %s28, 1
      %p287 = por %p285, %p286
      %p288 = scmp.ne.s32.totalorder %s279, %s280
      %p289 = scmp.eq.s32.totalorder %s28, 0
      %p290 = por %p288, %p289
      %p291 = scmp.ne.s32.totalorder %s279, %s280
      %p292 = scmp.eq.s32.totalorder %s29, 1
      %p293 = por %p291, %p292
      %p295 = scmp.ne.s32.totalorder %s280, %s294
      %p296 = scmp.eq.s32.totalorder %s29, 0
      %p297 = por %p295, %p296
      %s298 = ssub.s32 %s23, %s30
      %p299 = scmp.eq.s32.totalorder %s298, 0
      %s301 = sadd.s32 %s300, 1
      %s302 = scalar_select %p299, %s300, %s301
      %p305 = pneg %p299
      %p306 = scmp.eq.s32.totalorder %s23, 1
      %p307 = por %p305, %p306
      %p308 = scmp.ne.s32.totalorder %s300, %s303
      %p309 = scmp.eq.s32.totalorder %s23, 0
      %p310 = por %p308, %p309
      %p311 = scmp.ne.s32.totalorder %s300, %s303
      %p312 = scmp.eq.s32.totalorder %s28, 1
      %p313 = por %p311, %p312
      %p314 = scmp.ne.s32.totalorder %s303, %s304
      %p315 = scmp.eq.s32.totalorder %s28, 0
      %p316 = por %p314, %p315
      %p317 = scmp.ne.s32.totalorder %s303, %s304
      %p318 = scmp.eq.s32.totalorder %s29, 1
      %p319 = por %p317, %p318
      %p321 = scmp.ne.s32.totalorder %s304, %s320
      %p322 = scmp.eq.s32.totalorder %s29, 0
      %p323 = por %p321, %p322
      %s324 = ssub.s32 %s23, %s30
      %p325 = scmp.eq.s32.totalorder %s324, 0
      %s327 = sadd.s32 %s326, 1
      %s328 = scalar_select %p325, %s326, %s327
      %p331 = pneg %p325
      %p332 = scmp.eq.s32.totalorder %s23, 1
      %p333 = por %p331, %p332
      %p334 = scmp.ne.s32.totalorder %s326, %s329
      %p335 = scmp.eq.s32.totalorder %s23, 0
      %p336 = por %p334, %p335
      %p337 = scmp.ne.s32.totalorder %s326, %s329
      %p338 = scmp.eq.s32.totalorder %s28, 1
      %p339 = por %p337, %p338
      %p340 = scmp.ne.s32.totalorder %s329, %s330
      %p341 = scmp.eq.s32.totalorder %s28, 0
      %p342 = por %p340, %p341
      %p343 = scmp.ne.s32.totalorder %s329, %s330
      %p344 = scmp.eq.s32.totalorder %s29, 1
      %p345 = por %p343, %p344
      %p347 = scmp.ne.s32.totalorder %s330, %s346
      %p348 = scmp.eq.s32.totalorder %s29, 0
      %p349 = por %p347, %p348
      %p350 = scmp.le.s32.totalorder 1, %s23
      %p351 = scmp.lt.s32.totalorder %s23, 3
      %p352 = pnand %p350, %p351
      %p353 = pneg %p352
      // Predicated region
      $region9: #{tpu_custom_call.1} parent=5 // pred_check
        _
      $region10: #{tpu_custom_call.1} parent=5 // pred_check_branch
        %355 = sbr.rel (%p352) target = $region12
      $region11: #{tpu_custom_call.1} parent=5 // pred_region
        %s356 = ssub.s32 %s23, 1
        // Predicated region
        $region13: #{tpu_custom_call.1} parent=11 // pred_check
          %p357 = pneg %p122
        $region14: #{tpu_custom_call.1} parent=11 // pred_check_branch
          %359 = sbr.rel (%p357) target = $region16
        $region15: #{tpu_custom_call.1} parent=11 // pred_region
          _
        $region16: #{tpu_custom_call.1} parent=11 // pred_fallthru
          _
        // Predicated region
        $region17: #{tpu_custom_call.1} parent=11 // pred_check
          %p360 = pneg %p143
        $region18: #{tpu_custom_call.1} parent=11 // pred_check_branch
          %362 = sbr.rel (%p360) target = $region20
        $region19: #{tpu_custom_call.1} parent=11 // pred_region
          _
        $region20: #{tpu_custom_call.1} parent=11 // pred_fallthru
          _
        // Predicated region
        $region21: #{tpu_custom_call.1} parent=11 // pred_check
          %p363 = pneg %p164
        $region22: #{tpu_custom_call.1} parent=11 // pred_check_branch
          %365 = sbr.rel (%p363) target = $region24
        $region23: #{tpu_custom_call.1} parent=11 // pred_region
          _
        $region24: #{tpu_custom_call.1} parent=11 // pred_fallthru
          _
        // Predicated region
        $region25: #{tpu_custom_call.1} parent=11 // pred_check
          %p366 = pneg %p185
        $region26: #{tpu_custom_call.1} parent=11 // pred_check_branch
          %368 = sbr.rel (%p366) target = $region28
        $region27: #{tpu_custom_call.1} parent=11 // pred_region
          _
        $region28: #{tpu_custom_call.1} parent=11 // pred_fallthru
          _
        // Predicated region
        $region29: #{tpu_custom_call.1} parent=11 // pred_check
          %p369 = pneg %p206
        $region30: #{tpu_custom_call.1} parent=11 // pred_check_branch
          %371 = sbr.rel (%p369) target = $region32
        $region31: #{tpu_custom_call.1} parent=11 // pred_region
          _
        $region32: #{tpu_custom_call.1} parent=11 // pred_fallthru
          _
        // Predicated region
        $region33: #{tpu_custom_call.1} parent=11 // pred_check
          %p372 = pneg %p227
        $region34: #{tpu_custom_call.1} parent=11 // pred_check_branch
          %374 = sbr.rel (%p372) target = $region36
        $region35: #{tpu_custom_call.1} parent=11 // pred_region
          _
        $region36: #{tpu_custom_call.1} parent=11 // pred_fallthru
          _
        // Predicated region
        $region37: #{tpu_custom_call.1} parent=11 // pred_check
          %p375 = pneg %p248
        $region38: #{tpu_custom_call.1} parent=11 // pred_check_branch
          %377 = sbr.rel (%p375) target = $region40
        $region39: #{tpu_custom_call.1} parent=11 // pred_region
          _
        $region40: #{tpu_custom_call.1} parent=11 // pred_fallthru
          _
        // Predicated region
        $region41: #{tpu_custom_call.1} parent=11 // pred_check
          %p378 = pneg %p269
        $region42: #{tpu_custom_call.1} parent=11 // pred_check_branch
          %380 = sbr.rel (%p378) target = $region44
        $region43: #{tpu_custom_call.1} parent=11 // pred_region
          _
        $region44: #{tpu_custom_call.1} parent=11 // pred_fallthru
          _
        // Predicated region
        $region45: #{tpu_custom_call.1} parent=11 // pred_check
          %p381 = pneg %p290
        $region46: #{tpu_custom_call.1} parent=11 // pred_check_branch
          %383 = sbr.rel (%p381) target = $region48
        $region47: #{tpu_custom_call.1} parent=11 // pred_region
          _
        $region48: #{tpu_custom_call.1} parent=11 // pred_fallthru
          _
      $region12: #{tpu_custom_call.1} parent=5 // pred_fallthru
        _
      %p384 = scmp.lt.s32.totalorder %s23, 2
      // Predicated region
      $region49: #{tpu_custom_call.1} parent=5 // pred_check
        %p385 = pneg %p384
      $region50: #{tpu_custom_call.1} parent=5 // pred_check_branch
        %387 = sbr.rel (%p385) target = $region52
      $region51: #{tpu_custom_call.1} parent=5 // pred_region
        // Predicated region
        $region53: #{tpu_custom_call.1} parent=51 // pred_check
          %p388 = pneg %p43
        $region54: #{tpu_custom_call.1} parent=51 // pred_check_branch
          %390 = sbr.rel (%p388) target = $region56
        $region55: #{tpu_custom_call.1} parent=51 // pred_region
          %s391 = smul.u32 2, %s23
          %s392 = ssub.s32 3, %s391
          %p393 = scmp.lt.s32.totalorder %s392, 2
          %s394 = scalar_select %p393, %s392, 2
          %s395 = smul.u32 128, %s394
          %p396 = scmp.lt.s32.totalorder %s391, 2
          %s397 = scalar_select %p396, %s391, 2
          %s398 = smul.addr %s397, 8
          %s399 = scalar_lea.vmem %s0, %s398
          %s400 = smul.u32 2, %s23
          %s401 = ssub.s32 3, %s400
          %p402 = scmp.lt.s32.totalorder %s401, 2
          %s403 = scalar_select %p402, %s401, 2
          %s404 = smul.u32 128, %s403
        $region56: #{tpu_custom_call.1} parent=51 // pred_fallthru
          _
        // Predicated region
        $region57: #{tpu_custom_call.1} parent=51 // pred_check
          %p405 = pneg %p69
        $region58: #{tpu_custom_call.1} parent=51 // pred_check_branch
          %407 = sbr.rel (%p405) target = $region60
        $region59: #{tpu_custom_call.1} parent=51 // pred_region
          %s408 = smul.u32 2, %s23
          %s409 = ssub.s32 3, %s408
          %p410 = scmp.lt.s32.totalorder %s409, 2
          %s411 = scalar_select %p410, %s409, 2
          %s412 = smul.u32 128, %s411
          %p413 = scmp.lt.s32.totalorder %s408, 2
          %s414 = scalar_select %p413, %s408, 2
          %s415 = smul.addr %s414, 8
          %s416 = scalar_lea.vmem %s1, %s415
          %s417 = smul.u32 2, %s23
          %s418 = ssub.s32 3, %s417
          %p419 = scmp.lt.s32.totalorder %s418, 2
          %s420 = scalar_select %p419, %s418, 2
          %s421 = smul.u32 128, %s420
        $region60: #{tpu_custom_call.1} parent=51 // pred_fallthru
          _
        // Predicated region
        $region61: #{tpu_custom_call.1} parent=51 // pred_check
          %p422 = pneg %p95
        $region62: #{tpu_custom_call.1} parent=51 // pred_check_branch
          %424 = sbr.rel (%p422) target = $region64
        $region63: #{tpu_custom_call.1} parent=51 // pred_region
          %s425 = smul.u32 2, %s23
          %s426 = ssub.s32 3, %s425
          %p427 = scmp.lt.s32.totalorder %s426, 2
          %s428 = scalar_select %p427, %s426, 2
          %s429 = smul.u32 128, %s428
          %p430 = scmp.lt.s32.totalorder %s425, 2
          %s431 = scalar_select %p430, %s425, 2
          %s432 = smul.addr %s431, 8
          %s433 = scalar_lea.vmem %s2, %s432
          %s434 = smul.u32 2, %s23
          %s435 = ssub.s32 3, %s434
          %p436 = scmp.lt.s32.totalorder %s435, 2
          %s437 = scalar_select %p436, %s435, 2
          %s438 = smul.u32 128, %s437
        $region64: #{tpu_custom_call.1} parent=51 // pred_fallthru
          _
      $region52: #{tpu_custom_call.1} parent=5 // pred_fallthru
        _
      %p439 = scmp.le.s32.totalorder 1, %s23
      %p440 = scmp.lt.s32.totalorder %s23, 3
      %p441 = pnand %p439, %p440
      %p442 = pneg %p441
      // Predicated region
      $region65: #{tpu_custom_call.1} parent=5 // pred_check
        _
      $region66: #{tpu_custom_call.1} parent=5 // pred_check_branch
        %444 = sbr.rel (%p441) target = $region68
      $region67: #{tpu_custom_call.1} parent=5 // pred_region
        %s445 = ssub.s32 %s23, 1
        %s446 = smul.u32 2, %s28
        %s447 = ssub.s32 3, %s446
        %p448 = scmp.lt.s32.totalorder %s447, 2
        %s449 = scalar_select %p448, %s447, 2
        %s450 = smul.u32 128, %s449
        %p451 = scmp.lt.s32.totalorder %s446, 2
        %s452 = scalar_select %p451, %s446, 2
        %s453 = smul.addr %s452, 8
        %s454 = scalar_lea.vmem %s0, %s453
        %p455 = pneg %p49
        %p456 = pneg %p46
        %s457 = smul.u32 2, %s28
        %s458 = ssub.s32 3, %s457
        %p459 = scmp.lt.s32.totalorder %s458, 2
        %s460 = scalar_select %p459, %s458, 2
        %s461 = smul.u32 128, %s460
        %p462 = scmp.lt.s32.totalorder %s457, 2
        %s463 = scalar_select %p462, %s457, 2
        %s464 = smul.addr %s463, 8
        %s465 = scalar_lea.vmem %s1, %s464
        %p466 = pneg %p75
        %p467 = pneg %p72
        %s468 = smul.u32 2, %s28
        %s469 = ssub.s32 3, %s468
        %p470 = scmp.lt.s32.totalorder %s469, 2
        %s471 = scalar_select %p470, %s469, 2
        %s472 = smul.u32 128, %s471
        %p473 = scmp.lt.s32.totalorder %s468, 2
        %s474 = scalar_select %p473, %s468, 2
        %s475 = smul.addr %s474, 8
        %s476 = scalar_lea.vmem %s2, %s475
        %p477 = pneg %p101
        %p478 = pneg %p98
        %p479 = pneg %p122
        %p480 = pneg %p119
        %p481 = pneg %p143
        %p482 = pneg %p140
        %p483 = pneg %p164
        %p484 = pneg %p161
        %p485 = pneg %p185
        %p486 = pneg %p182
        %p487 = pneg %p206
        %p488 = pneg %p203
        %p489 = pneg %p227
        %p490 = pneg %p224
        %p491 = pneg %p248
        %p492 = pneg %p245
        %p493 = pneg %p269
        %p494 = pneg %p266
        %p495 = pneg %p290
        %p496 = pneg %p287
        %p497 = pneg %p316
        %p498 = pneg %p313
        %s499 = sand.u32 %s303, 1
        %s500 = scalar_lea.sflag [#allocation3], %s499
        %s501 = sand.u32 %s303, 1
        %s502 = smul.addr %s501, 16
        %s503 = scalar_lea.vmem [#allocation2], %s502
        %p504 = pneg %p342
        %p505 = pneg %p339
        %s506 = sand.u32 %s329, 1
        %s507 = sand.u32 %s329, 1
        %s508 = smul.addr %s507, 16
        %s509 = scalar_lea.vmem [#allocation4], %s508
        %s510 = smul.u32 2, %s28
        %s511 = ssub.s32 3, %s510
        %p512 = scmp.lt.s32.totalorder %s511, 2
        %s513 = scalar_select %p512, %s511, 2
        %s514 = smul.u32 128, %s513
        %p515 = scmp.lt.s32.totalorder %s510, 2
        %s516 = scalar_select %p515, %s510, 2
        %s517 = smul.addr %s516, 8
        %s518 = scalar_lea.vmem %s0, %s517
        %s519 = smul.u32 2, %s28
        %s520 = ssub.s32 3, %s519
        %p521 = scmp.lt.s32.totalorder %s520, 2
        %s522 = scalar_select %p521, %s520, 2
        %s523 = smul.u32 128, %s522
        %s524 = smul.u32 2, %s28
        %s525 = ssub.s32 3, %s524
        %p526 = scmp.lt.s32.totalorder %s525, 2
        %s527 = scalar_select %p526, %s525, 2
        %s528 = smul.u32 128, %s527
        %p529 = scmp.lt.s32.totalorder %s524, 2
        %s530 = scalar_select %p529, %s524, 2
        %s531 = smul.addr %s530, 8
        %s532 = scalar_lea.vmem %s1, %s531
        %s533 = smul.u32 2, %s28
        %s534 = ssub.s32 3, %s533
        %p535 = scmp.lt.s32.totalorder %s534, 2
        %s536 = scalar_select %p535, %s534, 2
        %s537 = smul.u32 128, %s536
        %s538 = smul.u32 2, %s28
        %s539 = ssub.s32 3, %s538
        %p540 = scmp.lt.s32.totalorder %s539, 2
        %s541 = scalar_select %p540, %s539, 2
        %s542 = smul.u32 128, %s541
        %p543 = scmp.lt.s32.totalorder %s538, 2
        %s544 = scalar_select %p543, %s538, 2
        %s545 = smul.addr %s544, 8
        %s546 = scalar_lea.vmem %s2, %s545
        %s547 = smul.u32 2, %s28
        %s548 = ssub.s32 3, %s547
        %p549 = scmp.lt.s32.totalorder %s548, 2
        %s550 = scalar_select %p549, %s548, 2
        %s551 = smul.u32 128, %s550
        %s552 = smul.u32 2, %s28
        %s553 = ssub.s32 3, %s552
        %p554 = scmp.lt.s32.totalorder %s553, 2
        %s555 = scalar_select %p554, %s553, 2
        %s556 = smul.u32 128, %s555
        %s557 = smul.u32 2, %s28
        %s558 = ssub.s32 3, %s557
        %p559 = scmp.lt.s32.totalorder %s558, 2
        %s560 = scalar_select %p559, %s558, 2
        %s561 = smul.u32 128, %s560
        %v562 = vld [vmem:[%s518] sm:$0xff]
        %v563 = vld [vmem:[%s518 + $0x8] sm:$0xff]
        %v564 = vld [vmem:[%s532] sm:$0xff]
        %v565 = vld [vmem:[%s532 + $0x8] sm:$0xff]
        %v566 = vld [vmem:[%s546] sm:$0xff]
        %v567 = vld [vmem:[%s546 + $0x8] sm:$0xff]
        %v568 = vld [vmem:[%s3] sm:$0xff]
        %v569 = vld [vmem:[%s3 + $0x8] sm:$0xff]
        %v570 = vld [vmem:[%s3 + $0x10] sm:$0xff]
        %v571 = vld [vmem:[%s3 + $0x18] sm:$0xff]
        %v572 = vld [vmem:[%s4] sm:$0xff]
        %v573 = vld [vmem:[%s4 + $0x8] sm:$0xff]
        %vm574 = vcmask 130048
        %v576 = vsel %vm574, %v564, 0
        %v579 = vsel %vm574, %v565, 0
        %581 = vmatprep.subr.mxu0 0.0
        %582 = vmatpush1.msra.mxu0 %v572
        %583 = vmatprep.subr.mxu0 0.0
        %584 = vmatpush1.msra.mxu0 %v573
        %585 = vmatprep.subr.mxu0 0.0
        %586 = vmatpush1.msra.mxu0 0.0
        %587 = vmatprep.subr.mxu0 0.0
        %588 = vmatpush1.msra.mxu0 0.0
        %589 = vmatprep.subr.mxu0 0.0
        %590 = vmatpush1.msra.mxu0 0.0
        %591 = vmatprep.subr.mxu0 0.0
        %592 = vmatpush1.msra.mxu0 0.0
        %593 = vmatprep.subr.mxu0 0.0
        %594 = vmatpush1.msra.mxu0 0.0
        %595 = vmatprep.subr.mxu0 0.0
        %596 = vmatpush1.msra.mxu0 0.0
        %597 = vmatprep.subr.mxu0 0.0
        %598 = vmatpush1.msra.mxu0 0.0
        %599 = vmatprep.subr.mxu0 0.0
        %600 = vmatpush1.msra.mxu0 0.0
        %601 = vmatprep.subr.mxu0 0.0
        %602 = vmatpush1.msra.mxu0 0.0
        %603 = vmatprep.subr.mxu0 0.0
        %604 = vmatpush1.msra.mxu0 0.0
        %605 = vmatprep.subr.mxu0 0.0
        %606 = vmatpush1.msra.mxu0 0.0
        %607 = vmatprep.subr.mxu0 0.0
        %608 = vmatpush1.msra.mxu0 0.0
        %609 = vmatprep.subr.mxu0 0.0
        %610 = vmatpush1.msra.mxu0 0.0
        %611 = vmatprep.subr.mxu0 0.0
        %612 = vmatpush1.msra.mxu0 0.0
        %613 = vmatprep.subr.mxu0 0.0
        %614 = vmatpush1.msra.mxu0 0.0
        %615 = vmatprep.subr.mxu0 0.0
        %616 = vmatpush1.msra.mxu0 0.0
        %617 = vmatprep.subr.mxu0 0.0
        %618 = vmatpush1.msra.mxu0 0.0
        %619 = vmatprep.subr.mxu0 0.0
        %620 = vmatpush1.msra.mxu0 0.0
        %621 = vmatprep.subr.mxu0 0.0
        %622 = vmatpush1.msra.mxu0 0.0
        %623 = vmatprep.subr.mxu0 0.0
        %624 = vmatpush1.msra.mxu0 0.0
        %625 = vmatprep.subr.mxu0 0.0
        %626 = vmatpush1.msra.mxu0 0.0
        %627 = vmatprep.subr.mxu0 0.0
        %628 = vmatpush1.msra.mxu0 0.0
        %629 = vmatprep.subr.mxu0 0.0
        %630 = vmatpush1.msra.mxu0 0.0
        %631 = vmatprep.subr.mxu0 0.0
        %632 = vmatpush1.msra.mxu0 0.0
        %633 = vmatprep.subr.mxu0 0.0
        %634 = vmatpush1.msra.mxu0 0.0
        %635 = vmatprep.subr.mxu0 0.0
        %636 = vmatpush1.msra.mxu0 0.0
        %637 = vmatprep.subr.mxu0 0.0
        %638 = vmatpush1.msra.mxu0 0.0
        %639 = vmatprep.subr.mxu0 0.0
        %640 = vmatpush1.msra.mxu0 0.0
        %641 = vmatprep.subr.mxu0 0.0
        %642 = vmatpush1.msra.mxu0 0.0
        %643 = vmatprep.subr.mxu0 0.0
        %644 = vmatpush1.msra.mxu0 0.0
        %645 = vmatprep.mubr.f32.mxu0 0.0
        %646 = vmatmul.mubr.f32.gmra.mrb[0].mxu0 %v576
        %v647 = vpop.f32.mrb[0].mxu0
        %v648 = vadd.f32 0.0, %v647
        %v649 = vpop.f32.mrb[0].mxu0
        %650 = vmatprep.mubr.f32.mxu0 0.0
        %651 = vmatmul.mubr.f32.gmra.mrb[0].mxu0 %v579
        %v652 = vpop.f32.mrb[0].mxu0
        %v653 = vadd.f32 0.0, %v652
        %v654 = vpop.f32.mrb[0].mxu0
        %655 = vdwg.mxu0
        %vm656 = vcmask 261120
        %v658 = vsel %vm656, %v562, 0
        %v661 = vsel %vm656, %v563, 0
        %663 = vmatprep.subr.mxu0 0.0
        %664 = vmatpush1.msra.mxu0 %v568
        %665 = vmatprep.subr.mxu0 0.0
        %666 = vmatpush1.msra.mxu0 %v569
        %667 = vmatprep.subr.mxu0 0.0
        %668 = vmatpush1.msra.mxu0 %v570
        %669 = vmatprep.subr.mxu0 0.0
        %670 = vmatpush1.msra.mxu0 %v571
        %671 = vmatprep.subr.mxu0 0.0
        %672 = vmatpush1.msra.mxu0 0.0
        %673 = vmatprep.subr.mxu0 0.0
        %674 = vmatpush1.msra.mxu0 0.0
        %675 = vmatprep.subr.mxu0 0.0
        %676 = vmatpush1.msra.mxu0 0.0
        %677 = vmatprep.subr.mxu0 0.0
        %678 = vmatpush1.msra.mxu0 0.0
        %679 = vmatprep.subr.mxu0 0.0
        %680 = vmatpush1.msra.mxu0 0.0
        %681 = vmatprep.subr.mxu0 0.0
        %682 = vmatpush1.msra.mxu0 0.0
        %683 = vmatprep.subr.mxu0 0.0
        %684 = vmatpush1.msra.mxu0 0.0
        %685 = vmatprep.subr.mxu0 0.0
        %686 = vmatpush1.msra.mxu0 0.0
        %687 = vmatprep.subr.mxu0 0.0
        %688 = vmatpush1.msra.mxu0 0.0
        %689 = vmatprep.subr.mxu0 0.0
        %690 = vmatpush1.msra.mxu0 0.0
        %691 = vmatprep.subr.mxu0 0.0
        %692 = vmatpush1.msra.mxu0 0.0
        %693 = vmatprep.subr.mxu0 0.0
        %694 = vmatpush1.msra.mxu0 0.0
        %695 = vmatprep.subr.mxu0 0.0
        %696 = vmatpush1.msra.mxu0 0.0
        %697 = vmatprep.subr.mxu0 0.0
        %698 = vmatpush1.msra.mxu0 0.0
        %699 = vmatprep.subr.mxu0 0.0
        %700 = vmatpush1.msra.mxu0 0.0
        %701 = vmatprep.subr.mxu0 0.0
        %702 = vmatpush1.msra.mxu0 0.0
        %703 = vmatprep.subr.mxu0 0.0
        %704 = vmatpush1.msra.mxu0 0.0
        %705 = vmatprep.subr.mxu0 0.0
        %706 = vmatpush1.msra.mxu0 0.0
        %707 = vmatprep.subr.mxu0 0.0
        %708 = vmatpush1.msra.mxu0 0.0
        %709 = vmatprep.subr.mxu0 0.0
        %710 = vmatpush1.msra.mxu0 0.0
        %711 = vmatprep.subr.mxu0 0.0
        %712 = vmatpush1.msra.mxu0 0.0
        %713 = vmatprep.subr.mxu0 0.0
        %714 = vmatpush1.msra.mxu0 0.0
        %715 = vmatprep.subr.mxu0 0.0
        %716 = vmatpush1.msra.mxu0 0.0
        %717 = vmatprep.subr.mxu0 0.0
        %718 = vmatpush1.msra.mxu0 0.0
        %719 = vmatprep.subr.mxu0 0.0
        %720 = vmatpush1.msra.mxu0 0.0
        %721 = vmatprep.subr.mxu0 0.0
        %722 = vmatpush1.msra.mxu0 0.0
        %723 = vmatprep.subr.mxu0 0.0
        %724 = vmatpush1.msra.mxu0 0.0
        %725 = vmatprep.subr.mxu0 0.0
        %726 = vmatpush1.msra.mxu0 0.0
        %727 = vmatprep.mubr.f32.mxu0 0.0
        %728 = vmatmul.mubr.f32.gmra.mrb[0].mxu0 %v658
        %v729 = vpop.f32.mrb[0].mxu0
        %v730 = vadd.f32 %v648, %v729
        %v731 = vpop.f32.mrb[0].mxu0
        %732 = vmatprep.mubr.f32.mxu0 0.0
        %733 = vmatmul.mubr.f32.gmra.mrb[0].mxu0 %v661
        %v734 = vpop.f32.mrb[0].mxu0
        %v735 = vadd.f32 %v653, %v734
        %v736 = vpop.f32.mrb[0].mxu0
        %737 = vdwg.mxu0
        %v738 = vld [vmem:[%s5] sm:$0x1]
        %v740 = vlaneseq
        %v741 = vshrl.u32 %v740, 7
        %v742 = vsub.s32 0, %v741
        %v743 = vrot.slane %v738, %v742
        %v745 = vadd.f32 %v730, %v743
        %v746 = vadd.f32 %v735, %v743
        %v747 = vtanh.pop %v745
        %v748 = vtanh.pop %v746
        %v749 = vld [vmem:[%s6] sm:$0xff]
        %v750 = vld [vmem:[%s8] sm:$0xff]
        %v751 = vld [vmem:[%s8 + $0x8] sm:$0xff]
        %v752 = vld [vmem:[%s8 + $0x10] sm:$0xff]
        %vm753 = vcmask 195584
        %v755 = vsel %vm753, %v747, 0
        %v758 = vsel %vm753, %v748, 0
        %760 = vmatprep.subr.mxu0 0.0
        %761 = vmatpush1.msra.mxu0 %v750
        %762 = vmatprep.subr.mxu0 0.0
        %763 = vmatpush1.msra.mxu0 %v751
        %764 = vmatprep.subr.mxu0 0.0
        %765 = vmatpush1.msra.mxu0 %v752
        %766 = vmatprep.subr.mxu0 0.0
        %767 = vmatpush1.msra.mxu0 0.0
        %768 = vmatprep.subr.mxu0 0.0
        %769 = vmatpush1.msra.mxu0 0.0
        %770 = vmatprep.subr.mxu0 0.0
        %771 = vmatpush1.msra.mxu0 0.0
        %772 = vmatprep.subr.mxu0 0.0
        %773 = vmatpush1.msra.mxu0 0.0
        %774 = vmatprep.subr.mxu0 0.0
        %775 = vmatpush1.msra.mxu0 0.0
        %776 = vmatprep.subr.mxu0 0.0
        %777 = vmatpush1.msra.mxu0 0.0
        %778 = vmatprep.subr.mxu0 0.0
        %779 = vmatpush1.msra.mxu0 0.0
        %780 = vmatprep.subr.mxu0 0.0
        %781 = vmatpush1.msra.mxu0 0.0
        %782 = vmatprep.subr.mxu0 0.0
        %783 = vmatpush1.msra.mxu0 0.0
        %784 = vmatprep.subr.mxu0 0.0
        %785 = vmatpush1.msra.mxu0 0.0
        %786 = vmatprep.subr.mxu0 0.0
        %787 = vmatpush1.msra.mxu0 0.0
        %788 = vmatprep.subr.mxu0 0.0
        %789 = vmatpush1.msra.mxu0 0.0
        %790 = vmatprep.subr.mxu0 0.0
        %791 = vmatpush1.msra.mxu0 0.0
        %792 = vmatprep.subr.mxu0 0.0
        %793 = vmatpush1.msra.mxu0 0.0
        %794 = vmatprep.subr.mxu0 0.0
        %795 = vmatpush1.msra.mxu0 0.0
        %796 = vmatprep.subr.mxu0 0.0
        %797 = vmatpush1.msra.mxu0 0.0
        %798 = vmatprep.subr.mxu0 0.0
        %799 = vmatpush1.msra.mxu0 0.0
        %800 = vmatprep.subr.mxu0 0.0
        %801 = vmatpush1.msra.mxu0 0.0
        %802 = vmatprep.subr.mxu0 0.0
        %803 = vmatpush1.msra.mxu0 0.0
        %804 = vmatprep.subr.mxu0 0.0
        %805 = vmatpush1.msra.mxu0 0.0
        %806 = vmatprep.subr.mxu0 0.0
        %807 = vmatpush1.msra.mxu0 0.0
        %808 = vmatprep.subr.mxu0 0.0
        %809 = vmatpush1.msra.mxu0 0.0
        %810 = vmatprep.subr.mxu0 0.0
        %811 = vmatpush1.msra.mxu0 0.0
        %812 = vmatprep.subr.mxu0 0.0
        %813 = vmatpush1.msra.mxu0 0.0
        %814 = vmatprep.subr.mxu0 0.0
        %815 = vmatpush1.msra.mxu0 0.0
        %816 = vmatprep.subr.mxu0 0.0
        %817 = vmatpush1.msra.mxu0 0.0
        %818 = vmatprep.subr.mxu0 0.0
        %819 = vmatpush1.msra.mxu0 0.0
        %820 = vmatprep.subr.mxu0 0.0
        %821 = vmatpush1.msra.mxu0 0.0
        %822 = vmatprep.subr.mxu0 0.0
        %823 = vmatpush1.msra.mxu0 0.0
        %824 = vmatprep.mubr.f32.mxu0 0.0
        %825 = vmatmul.mubr.f32.gmra.mrb[0].mxu0 %v755
        %v826 = vpop.f32.mrb[0].mxu0
        %v827 = vadd.f32 0.0, %v826
        %v828 = vpop.f32.mrb[0].mxu0
        %829 = vmatprep.mubr.f32.mxu0 0.0
        %830 = vmatmul.mubr.f32.gmra.mrb[0].mxu0 %v758
        %v831 = vpop.f32.mrb[0].mxu0
        %v832 = vadd.f32 0.0, %v831
        %v833 = vpop.f32.mrb[0].mxu0
        %834 = vdwg.mxu0
        %vm835 = vcmask 64512
        %v837 = vsel %vm835, %v566, 0
        %v840 = vsel %vm835, %v567, 0
        %842 = vmatprep.subr.mxu0 0.0
        %843 = vmatpush1.msra.mxu0 %v749
        %844 = vmatprep.subr.mxu0 0.0
        %845 = vmatpush1.msra.mxu0 0.0
        %846 = vmatprep.subr.mxu0 0.0
        %847 = vmatpush1.msra.mxu0 0.0
        %848 = vmatprep.subr.mxu0 0.0
        %849 = vmatpush1.msra.mxu0 0.0
        %850 = vmatprep.subr.mxu0 0.0
        %851 = vmatpush1.msra.mxu0 0.0
        %852 = vmatprep.subr.mxu0 0.0
        %853 = vmatpush1.msra.mxu0 0.0
        %854 = vmatprep.subr.mxu0 0.0
        %855 = vmatpush1.msra.mxu0 0.0
        %856 = vmatprep.subr.mxu0 0.0
        %857 = vmatpush1.msra.mxu0 0.0
        %858 = vmatprep.subr.mxu0 0.0
        %859 = vmatpush1.msra.mxu0 0.0
        %860 = vmatprep.subr.mxu0 0.0
        %861 = vmatpush1.msra.mxu0 0.0
        %862 = vmatprep.subr.mxu0 0.0
        %863 = vmatpush1.msra.mxu0 0.0
        %864 = vmatprep.subr.mxu0 0.0
        %865 = vmatpush1.msra.mxu0 0.0
        %866 = vmatprep.subr.mxu0 0.0
        %867 = vmatpush1.msra.mxu0 0.0
        %868 = vmatprep.subr.mxu0 0.0
        %869 = vmatpush1.msra.mxu0 0.0
        %870 = vmatprep.subr.mxu0 0.0
        %871 = vmatpush1.msra.mxu0 0.0
        %872 = vmatprep.subr.mxu0 0.0
        %873 = vmatpush1.msra.mxu0 0.0
        %874 = vmatprep.subr.mxu0 0.0
        %875 = vmatpush1.msra.mxu0 0.0
        %876 = vmatprep.subr.mxu0 0.0
        %877 = vmatpush1.msra.mxu0 0.0
        %878 = vmatprep.subr.mxu0 0.0
        %879 = vmatpush1.msra.mxu0 0.0
        %880 = vmatprep.subr.mxu0 0.0
        %881 = vmatpush1.msra.mxu0 0.0
        %882 = vmatprep.subr.mxu0 0.0
        %883 = vmatpush1.msra.mxu0 0.0
        %884 = vmatprep.subr.mxu0 0.0
        %885 = vmatpush1.msra.mxu0 0.0
        %886 = vmatprep.subr.mxu0 0.0
        %887 = vmatpush1.msra.mxu0 0.0
        %888 = vmatprep.subr.mxu0 0.0
        %889 = vmatpush1.msra.mxu0 0.0
        %890 = vmatprep.subr.mxu0 0.0
        %891 = vmatpush1.msra.mxu0 0.0
        %892 = vmatprep.subr.mxu0 0.0
        %893 = vmatpush1.msra.mxu0 0.0
        %894 = vmatprep.subr.mxu0 0.0
        %895 = vmatpush1.msra.mxu0 0.0
        %896 = vmatprep.subr.mxu0 0.0
        %897 = vmatpush1.msra.mxu0 0.0
        %898 = vmatprep.subr.mxu0 0.0
        %899 = vmatpush1.msra.mxu0 0.0
        %900 = vmatprep.subr.mxu0 0.0
        %901 = vmatpush1.msra.mxu0 0.0
        %902 = vmatprep.subr.mxu0 0.0
        %903 = vmatpush1.msra.mxu0 0.0
        %904 = vmatprep.subr.mxu0 0.0
        %905 = vmatpush1.msra.mxu0 0.0
        %906 = vmatprep.mubr.f32.mxu0 0.0
        %907 = vmatmul.mubr.f32.gmra.mrb[0].mxu0 %v837
        %v908 = vpop.f32.mrb[0].mxu0
        %v909 = vadd.f32 %v827, %v908
        %v910 = vpop.f32.mrb[0].mxu0
        %911 = vmatprep.mubr.f32.mxu0 0.0
        %912 = vmatmul.mubr.f32.gmra.mrb[0].mxu0 %v840
        %v913 = vpop.f32.mrb[0].mxu0
        %v914 = vadd.f32 %v832, %v913
        %v915 = vpop.f32.mrb[0].mxu0
        %916 = vdwg.mxu0
        %v917 = vld [vmem:[%s10] sm:$0x1]
        %v919 = vlaneseq
        %v920 = vshrl.u32 %v919, 7
        %v921 = vsub.s32 0, %v920
        %v922 = vrot.slane %v917, %v921
        %v924 = vadd.f32 %v909, %v922
        %v925 = vadd.f32 %v914, %v922
        %v926 = vld [vmem:[%s7] sm:$0xff]
        %v927 = vld [vmem:[%s9] sm:$0xff]
        %v928 = vld [vmem:[%s9 + $0x8] sm:$0xff]
        %v929 = vld [vmem:[%s9 + $0x10] sm:$0xff]
        %930 = vmatprep.subr.mxu0 0.0
        %931 = vmatpush1.msra.mxu0 %v927
        %932 = vmatprep.subr.mxu0 0.0
        %933 = vmatpush1.msra.mxu0 %v928
        %934 = vmatprep.subr.mxu0 0.0
        %935 = vmatpush1.msra.mxu0 %v929
        %936 = vmatprep.subr.mxu0 0.0
        %937 = vmatpush1.msra.mxu0 0.0
        %938 = vmatprep.subr.mxu0 0.0
        %939 = vmatpush1.msra.mxu0 0.0
        %940 = vmatprep.subr.mxu0 0.0
        %941 = vmatpush1.msra.mxu0 0.0
        %942 = vmatprep.subr.mxu0 0.0
        %943 = vmatpush1.msra.mxu0 0.0
        %944 = vmatprep.subr.mxu0 0.0
        %945 = vmatpush1.msra.mxu0 0.0
        %946 = vmatprep.subr.mxu0 0.0
        %947 = vmatpush1.msra.mxu0 0.0
        %948 = vmatprep.subr.mxu0 0.0
        %949 = vmatpush1.msra.mxu0 0.0
        %950 = vmatprep.subr.mxu0 0.0
        %951 = vmatpush1.msra.mxu0 0.0
        %952 = vmatprep.subr.mxu0 0.0
        %953 = vmatpush1.msra.mxu0 0.0
        %954 = vmatprep.subr.mxu0 0.0
        %955 = vmatpush1.msra.mxu0 0.0
        %956 = vmatprep.subr.mxu0 0.0
        %957 = vmatpush1.msra.mxu0 0.0
        %958 = vmatprep.subr.mxu0 0.0
        %959 = vmatpush1.msra.mxu0 0.0
        %960 = vmatprep.subr.mxu0 0.0
        %961 = vmatpush1.msra.mxu0 0.0
        %962 = vmatprep.subr.mxu0 0.0
        %963 = vmatpush1.msra.mxu0 0.0
        %964 = vmatprep.subr.mxu0 0.0
        %965 = vmatpush1.msra.mxu0 0.0
        %966 = vmatprep.subr.mxu0 0.0
        %967 = vmatpush1.msra.mxu0 0.0
        %968 = vmatprep.subr.mxu0 0.0
        %969 = vmatpush1.msra.mxu0 0.0
        %970 = vmatprep.subr.mxu0 0.0
        %971 = vmatpush1.msra.mxu0 0.0
        %972 = vmatprep.subr.mxu0 0.0
        %973 = vmatpush1.msra.mxu0 0.0
        %974 = vmatprep.subr.mxu0 0.0
        %975 = vmatpush1.msra.mxu0 0.0
        %976 = vmatprep.subr.mxu0 0.0
        %977 = vmatpush1.msra.mxu0 0.0
        %978 = vmatprep.subr.mxu0 0.0
        %979 = vmatpush1.msra.mxu0 0.0
        %980 = vmatprep.subr.mxu0 0.0
        %981 = vmatpush1.msra.mxu0 0.0
        %982 = vmatprep.subr.mxu0 0.0
        %983 = vmatpush1.msra.mxu0 0.0
        %984 = vmatprep.subr.mxu0 0.0
        %985 = vmatpush1.msra.mxu0 0.0
        %986 = vmatprep.subr.mxu0 0.0
        %987 = vmatpush1.msra.mxu0 0.0
        %988 = vmatprep.subr.mxu0 0.0
        %989 = vmatpush1.msra.mxu0 0.0
        %990 = vmatprep.subr.mxu0 0.0
        %991 = vmatpush1.msra.mxu0 0.0
        %992 = vmatprep.subr.mxu0 0.0
        %993 = vmatpush1.msra.mxu0 0.0
        %994 = vmatprep.mubr.f32.mxu0 0.0
        %995 = vmatmul.mubr.f32.gmra.mrb[0].mxu0 %v755
        %v996 = vpop.f32.mrb[0].mxu0
        %v997 = vadd.f32 0.0, %v996
        %v998 = vpop.f32.mrb[0].mxu0
        %999 = vmatprep.mubr.f32.mxu0 0.0
        %1000 = vmatmul.mubr.f32.gmra.mrb[0].mxu0 %v758
        %v1001 = vpop.f32.mrb[0].mxu0
        %v1002 = vadd.f32 0.0, %v1001
        %v1003 = vpop.f32.mrb[0].mxu0
        %1004 = vdwg.mxu0
        %1005 = vmatprep.subr.mxu0 0.0
        %1006 = vmatpush1.msra.mxu0 %v926
        %1007 = vmatprep.subr.mxu0 0.0
        %1008 = vmatpush1.msra.mxu0 0.0
        %1009 = vmatprep.subr.mxu0 0.0
        %1010 = vmatpush1.msra.mxu0 0.0
        %1011 = vmatprep.subr.mxu0 0.0
        %1012 = vmatpush1.msra.mxu0 0.0
        %1013 = vmatprep.subr.mxu0 0.0
        %1014 = vmatpush1.msra.mxu0 0.0
        %1015 = vmatprep.subr.mxu0 0.0
        %1016 = vmatpush1.msra.mxu0 0.0
        %1017 = vmatprep.subr.mxu0 0.0
        %1018 = vmatpush1.msra.mxu0 0.0
        %1019 = vmatprep.subr.mxu0 0.0
        %1020 = vmatpush1.msra.mxu0 0.0
        %1021 = vmatprep.subr.mxu0 0.0
        %1022 = vmatpush1.msra.mxu0 0.0
        %1023 = vmatprep.subr.mxu0 0.0
        %1024 = vmatpush1.msra.mxu0 0.0
        %1025 = vmatprep.subr.mxu0 0.0
        %1026 = vmatpush1.msra.mxu0 0.0
        %1027 = vmatprep.subr.mxu0 0.0
        %1028 = vmatpush1.msra.mxu0 0.0
        %1029 = vmatprep.subr.mxu0 0.0
        %1030 = vmatpush1.msra.mxu0 0.0
        %1031 = vmatprep.subr.mxu0 0.0
        %1032 = vmatpush1.msra.mxu0 0.0
        %1033 = vmatprep.subr.mxu0 0.0
        %1034 = vmatpush1.msra.mxu0 0.0
        %1035 = vmatprep.subr.mxu0 0.0
        %1036 = vmatpush1.msra.mxu0 0.0
        %1037 = vmatprep.subr.mxu0 0.0
        %1038 = vmatpush1.msra.mxu0 0.0
        %1039 = vmatprep.subr.mxu0 0.0
        %1040 = vmatpush1.msra.mxu0 0.0
        %1041 = vmatprep.subr.mxu0 0.0
        %1042 = vmatpush1.msra.mxu0 0.0
        %1043 = vmatprep.subr.mxu0 0.0
        %1044 = vmatpush1.msra.mxu0 0.0
        %1045 = vmatprep.subr.mxu0 0.0
        %1046 = vmatpush1.msra.mxu0 0.0
        %1047 = vmatprep.subr.mxu0 0.0
        %1048 = vmatpush1.msra.mxu0 0.0
        %1049 = vmatprep.subr.mxu0 0.0
        %1050 = vmatpush1.msra.mxu0 0.0
        %1051 = vmatprep.subr.mxu0 0.0
        %1052 = vmatpush1.msra.mxu0 0.0
        %1053 = vmatprep.subr.mxu0 0.0
        %1054 = vmatpush1.msra.mxu0 0.0
        %1055 = vmatprep.subr.mxu0 0.0
        %1056 = vmatpush1.msra.mxu0 0.0
        %1057 = vmatprep.subr.mxu0 0.0
        %1058 = vmatpush1.msra.mxu0 0.0
        %1059 = vmatprep.subr.mxu0 0.0
        %1060 = vmatpush1.msra.mxu0 0.0
        %1061 = vmatprep.subr.mxu0 0.0
        %1062 = vmatpush1.msra.mxu0 0.0
        %1063 = vmatprep.subr.mxu0 0.0
        %1064 = vmatpush1.msra.mxu0 0.0
        %1065 = vmatprep.subr.mxu0 0.0
        %1066 = vmatpush1.msra.mxu0 0.0
        %1067 = vmatprep.subr.mxu0 0.0
        %1068 = vmatpush1.msra.mxu0 0.0
        %1069 = vmatprep.mubr.f32.mxu0 0.0
        %1070 = vmatmul.mubr.f32.gmra.mrb[0].mxu0 %v837
        %v1071 = vpop.f32.mrb[0].mxu0
        %v1072 = vadd.f32 %v997, %v1071
        %v1073 = vpop.f32.mrb[0].mxu0
        %1074 = vmatprep.mubr.f32.mxu0 0.0
        %1075 = vmatmul.mubr.f32.gmra.mrb[0].mxu0 %v840
        %v1076 = vpop.f32.mrb[0].mxu0
        %v1077 = vadd.f32 %v1002, %v1076
        %v1078 = vpop.f32.mrb[0].mxu0
        %1079 = vdwg.mxu0
        %v1080 = vld [vmem:[%s11] sm:$0x1]
        %v1082 = vlaneseq
        %v1083 = vshrl.u32 %v1082, 7
        %v1084 = vsub.s32 0, %v1083
        %v1085 = vrot.slane %v1080, %v1084
        %v1087 = vadd.f32 %v1072, %v1085
        %v1088 = vadd.f32 %v1077, %v1085
        %v1089 = vmul.f32 %v924, 1.442695
        %v1090 = vpow.pop %v1089
        %v1091 = vmul.f32 %v925, 1.442695
        %v1092 = vpow.pop %v1091
        %v1093 = vmul.f32 %v562, %v1090
        %v1094 = vmul.f32 %v563, %v1092
        %v1095 = vadd.f32 %v1093, %v1087
        %v1096 = vadd.f32 %v1094, %v1088
        %1097 = vst.msk [vmem:[%s503] sm:$0xff] %vm656, %v1095
        %1098 = vst.msk [vmem:[%s503 + $0x8] sm:$0xff] %vm656, %v1096
        %v1099 = vsel %vm656, %v924, 0.0
        %1100 = vadd.xlane.f32.xlu0 %v1099
        %v1101 = vpop.xlane.xlu0 %1100
        %v1102 = vsel %vm656, %v925, 0.0
        %1103 = vadd.xlane.f32.xlu0 %v1102
        %v1104 = vpop.xlane.xlu0 %1103
        %vm1105 = vcmask 7168
        %1106 = vst.msk [vmem:[%s509] sm:$0xff] %vm1105, %v1101
        %1107 = vst.msk [vmem:[%s509 + $0x8] sm:$0xff] %vm1105, %v1104
        %s1108 = sand.u32 %s303, 1
        %s1109 = scalar_lea.sflag [#allocation3], %s1108
        %s1110 = sand.u32 %s303, 1
        %s1111 = smul.addr %s1110, 16
        %s1112 = scalar_lea.vmem [#allocation2], %s1111
        %s1113 = sand.u32 %s329, 1
        %s1114 = sand.u32 %s329, 1
        %s1115 = smul.addr %s1114, 16
        %s1116 = scalar_lea.vmem [#allocation4], %s1115
        // Predicated region
        $region69: #{tpu_custom_call.1} parent=67 // pred_check
          %p1117 = pneg %p313
        $region70: #{tpu_custom_call.1} parent=67 // pred_check_branch
          %1119 = sbr.rel (%p1117) target = $region72
        $region71: #{tpu_custom_call.1} parent=67 // pred_region
          %s1120 = smul.u32 2, %s28
          %s1121 = ssub.s32 3, %s1120
          %p1122 = scmp.lt.s32.totalorder %s1121, 2
          %s1123 = scalar_select %p1122, %s1121, 2
          %s1124 = smul.u32 128, %s1123
          %s1126 = ssub.s32 256, %s1124
          %1127 = vsyncadd %s1109, %s1126
          %p1128 = scmp.ne.s32.totalorder 0, %s1124
          %s1129 = smul.addr %s1120, 128
          %s1130 = scalar_lea.hbm %s12, %s1129
          %s1131 = smul.u32 8, %s1123
          %s1132 = sshll.u32 %s1112, 4
          %s1133 = int_to_ptr.vmem [resolvable:$true] %s1132
          %s1134 = sshll.u32 %s1131, 4
          %1138 = dma.vmem_to_hbm [thread:$0]  (%p1128), %s1133, %s1134, %s1130, %s1109, 128, 128, 8
        $region72: #{tpu_custom_call.1} parent=67 // pred_fallthru
          _
        // Predicated region
        $region73: #{tpu_custom_call.1} parent=67 // pred_check
          %p1139 = pneg %p339
        $region74: #{tpu_custom_call.1} parent=67 // pred_check_branch
          %1141 = sbr.rel (%p1139) target = $region76
        $region75: #{tpu_custom_call.1} parent=67 // pred_region
          %s1142 = smul.u32 2, %s28
          %s1143 = ssub.s32 3, %s1142
          %p1144 = scmp.lt.s32.totalorder %s1143, 2
          %s1145 = scalar_select %p1144, %s1143, 2
          %s1146 = smul.u32 128, %s1145
          %p1147 = scmp.ne.s32.totalorder 0, %s1146
          %s1148 = smul.addr %s1142, 8
          %s1149 = scalar_lea.vmem %s13, %s1148
          // Predicated region
          $region77: #{tpu_custom_call.1} parent=75 // pred_check
            %p1150 = pneg %p1147
          $region78: #{tpu_custom_call.1} parent=75 // pred_check_branch
            %1152 = sbr.rel (%p1150) target = $region80
          $region79: #{tpu_custom_call.1} parent=75 // pred_region
            // Predicated region
            $region81: #{tpu_custom_call.1} parent=79 // pred_check
              _
            $region82: #{tpu_custom_call.1} parent=79 // pred_check_branch
              %1154 = sbr.rel (0) target = $region84
            $region83: #{tpu_custom_call.1} parent=79 // pred_region
              // Predicated region
              $region103: #{tpu_custom_call.1} parent=83 // pred_check
                _
              $region104: #{tpu_custom_call.1} parent=83 // pred_check_branch
                %1205 = sbr.rel (0) target = $region106
              $region105: #{tpu_custom_call.1} parent=83 // pred_region
                %s1206 = sshrl.u32 %s1145, 1
                // While loop
                $region107: #{tpu_custom_call.1} parent=105 // loop_pre_header
                  _
                $region108: #{tpu_custom_call.1} parent=105 // loop_header
                  %s1208 = sphi 0, %s1210
                  %p1209 = scmp.ge.s32.totalorder %s1208, %s1206
                  %s1213 = sphi 0, %s1222
                  %s1214 = sphi %s1116, %s1225
                  %s1215 = sphi %s1149, %s1226
                $region109: #{tpu_custom_call.1} parent=105 // loop_header_branch
                  %1212 = sbr.rel (%p1209) target = $region113
                $region110: #{tpu_custom_call.1} parent=105 // loop_body
                  %v1216 = vld [vmem:[%s1214] sm:$0xff]
                  %1217 = vst [vmem:[%s1215] sm:$0xff] %v1216
                  %v1218 = vld [vmem:[%s1214 + $0x8] sm:$0xff]
                  %1219 = vst [vmem:[%s1215 + $0x8] sm:$0xff] %v1218
                  %s1220 = sadd.s32 1, %s1213
                  %p1221 = scmp.ge.s32.totalorder %s1220, %s1206
                  %s1222 = scalar_select %p1221, 0, %s1220
                  %s1223 = smul.u32 %s1222, 16
                  %s1224 = smul.u32 %s1222, 16
                  %s1225 = scalar_lea.vmem %s1116, %s1223 [#allocation4]
                  %s1226 = scalar_lea.vmem %s1149, %s1224
                $region111: #{tpu_custom_call.1} parent=105 // loop_footer
                  %s1210 = sadd.s32 %s1208, 1
                $region112: #{tpu_custom_call.1} parent=105 // loop_footer_branch
                  %1207 = sbr.rel target = $region108
                $region113: #{tpu_custom_call.1} parent=105 // loop_exit
                  _
                %s1227 = sshrl.u32 %s1145, 1
                %s1228 = sand.u32 %s1145, 1
                %s1229 = smul.u32 %s1227, 2
                %s1230 = smul.u32 8, %s1229
                %s1231 = scalar_lea.vmem %s1116, %s1230 [#allocation4]
                %s1232 = smul.u32 8, %s1229
                %s1233 = scalar_lea.vmem %s1149, %s1232
                // While loop
                $region114: #{tpu_custom_call.1} parent=105 // loop_pre_header
                  _
                $region115: #{tpu_custom_call.1} parent=105 // loop_header
                  %s1235 = sphi 0, %s1237
                  %p1236 = scmp.ge.s32.totalorder %s1235, %s1228
                  %s1240 = sphi 0, %s1247
                  %s1241 = sphi %s1231, %s1250
                  %s1242 = sphi %s1233, %s1251
                $region116: #{tpu_custom_call.1} parent=105 // loop_header_branch
                  %1239 = sbr.rel (%p1236) target = $region120
                $region117: #{tpu_custom_call.1} parent=105 // loop_body
                  %v1243 = vld [vmem:[%s1241] sm:$0xff]
                  %1244 = vst [vmem:[%s1242] sm:$0xff] %v1243
                  %s1245 = sadd.s32 1, %s1240
                  %p1246 = scmp.ge.s32.totalorder %s1245, %s1228
                  %s1247 = scalar_select %p1246, 0, %s1245
                  %s1248 = smul.u32 %s1247, 8
                  %s1249 = smul.u32 %s1247, 8
                  %s1250 = scalar_lea.vmem %s1231, %s1248 [#allocation4]
                  %s1251 = scalar_lea.vmem %s1233, %s1249
                $region118: #{tpu_custom_call.1} parent=105 // loop_footer
                  %s1237 = sadd.s32 %s1235, 1
                $region119: #{tpu_custom_call.1} parent=105 // loop_footer_branch
                  %1234 = sbr.rel target = $region115
                $region120: #{tpu_custom_call.1} parent=105 // loop_exit
                  _
              $region106: #{tpu_custom_call.1} parent=83 // pred_fallthru
                _
              // Predicated region
              $region121: #{tpu_custom_call.1} parent=83 // pred_check
                _
              $region122: #{tpu_custom_call.1} parent=83 // pred_check_branch
                %1253 = sbr.rel target = $region124
              $region123: #{tpu_custom_call.1} parent=83 // pred_region
                _
              $region124: #{tpu_custom_call.1} parent=83 // pred_fallthru
                _
            $region84: #{tpu_custom_call.1} parent=79 // pred_fallthru
              _
            // Predicated region
            $region85: #{tpu_custom_call.1} parent=79 // pred_check
              _
            $region86: #{tpu_custom_call.1} parent=79 // pred_check_branch
              %1156 = sbr.rel target = $region88
            $region87: #{tpu_custom_call.1} parent=79 // pred_region
              %s1158 = sshrl.u32 %s1145, 1
              // While loop
              $region89: #{tpu_custom_call.1} parent=87 // loop_pre_header
                _
              $region90: #{tpu_custom_call.1} parent=87 // loop_header
                %s1160 = sphi 0, %s1162
                %p1161 = scmp.ge.s32.totalorder %s1160, %s1158
                %s1165 = sphi 0, %s1174
                %s1166 = sphi %s1116, %s1177
                %s1167 = sphi %s1149, %s1178
              $region91: #{tpu_custom_call.1} parent=87 // loop_header_branch
                %1164 = sbr.rel (%p1161) target = $region95
              $region92: #{tpu_custom_call.1} parent=87 // loop_body
                %v1168 = vld [vmem:[%s1166] sm:$0xff]
                %1169 = vst [vmem:[%s1167] sm:$0xff] %v1168
                %v1170 = vld [vmem:[%s1166 + $0x8] sm:$0xff]
                %1171 = vst [vmem:[%s1167 + $0x8] sm:$0xff] %v1170
                %s1172 = sadd.s32 1, %s1165
                %p1173 = scmp.ge.s32.totalorder %s1172, %s1158
                %s1174 = scalar_select %p1173, 0, %s1172
                %s1175 = smul.u32 %s1174, 16
                %s1176 = smul.u32 %s1174, 16
                %s1177 = scalar_lea.vmem %s1116, %s1175 [#allocation4]
                %s1178 = scalar_lea.vmem %s1149, %s1176
              $region93: #{tpu_custom_call.1} parent=87 // loop_footer
                %s1162 = sadd.s32 %s1160, 1
              $region94: #{tpu_custom_call.1} parent=87 // loop_footer_branch
                %1159 = sbr.rel target = $region90
              $region95: #{tpu_custom_call.1} parent=87 // loop_exit
                _
              %s1179 = sshrl.u32 %s1145, 1
              %s1180 = sand.u32 %s1145, 1
              %s1181 = smul.u32 %s1179, 2
              %s1182 = smul.u32 8, %s1181
              %s1183 = scalar_lea.vmem %s1116, %s1182 [#allocation4]
              %s1184 = smul.u32 8, %s1181
              %s1185 = scalar_lea.vmem %s1149, %s1184
              // While loop
              $region96: #{tpu_custom_call.1} parent=87 // loop_pre_header
                _
              $region97: #{tpu_custom_call.1} parent=87 // loop_header
                %s1187 = sphi 0, %s1189
                %p1188 = scmp.ge.s32.totalorder %s1187, %s1180
                %s1192 = sphi 0, %s1199
                %s1193 = sphi %s1183, %s1202
                %s1194 = sphi %s1185, %s1203
              $region98: #{tpu_custom_call.1} parent=87 // loop_header_branch
                %1191 = sbr.rel (%p1188) target = $region102
              $region99: #{tpu_custom_call.1} parent=87 // loop_body
                %v1195 = vld [vmem:[%s1193] sm:$0xff]
                %1196 = vst [vmem:[%s1194] sm:$0xff] %v1195
                %s1197 = sadd.s32 1, %s1192
                %p1198 = scmp.ge.s32.totalorder %s1197, %s1180
                %s1199 = scalar_select %p1198, 0, %s1197
                %s1200 = smul.u32 %s1199, 8
                %s1201 = smul.u32 %s1199, 8
                %s1202 = scalar_lea.vmem %s1183, %s1200 [#allocation4]
                %s1203 = scalar_lea.vmem %s1185, %s1201
              $region100: #{tpu_custom_call.1} parent=87 // loop_footer
                %s1189 = sadd.s32 %s1187, 1
              $region101: #{tpu_custom_call.1} parent=87 // loop_footer_branch
                %1186 = sbr.rel target = $region97
              $region102: #{tpu_custom_call.1} parent=87 // loop_exit
                _
            $region88: #{tpu_custom_call.1} parent=79 // pred_fallthru
              _
          $region80: #{tpu_custom_call.1} parent=75 // pred_fallthru
            _
          %1254 = vnop
        $region76: #{tpu_custom_call.1} parent=67 // pred_fallthru
          _
      $region68: #{tpu_custom_call.1} parent=5 // pred_fallthru
        _
      %p1255 = scmp.le.s32.totalorder 2, %s23
      // Predicated region
      $region125: #{tpu_custom_call.1} parent=5 // pred_check
        %p1256 = pneg %p1255
      $region126: #{tpu_custom_call.1} parent=5 // pred_check_branch
        %1258 = sbr.rel (%p1256) target = $region128
      $region127: #{tpu_custom_call.1} parent=5 // pred_region
        %s1259 = ssub.s32 %s23, 2
        // Predicated region
        $region129: #{tpu_custom_call.1} parent=127 // pred_check
          %p1260 = pneg %p319
        $region130: #{tpu_custom_call.1} parent=127 // pred_check_branch
          %1262 = sbr.rel (%p1260) target = $region132
        $region131: #{tpu_custom_call.1} parent=127 // pred_region
          %s1263 = sand.u32 %s304, 1
          %s1264 = scalar_lea.sflag [#allocation3], %s1263
          %s1265 = sand.u32 %s304, 1
          %s1266 = smul.addr %s1265, 16
          %s1267 = scalar_lea.vmem [#allocation2], %s1266
          %1268 = dma.done %s1264, 256
        $region132: #{tpu_custom_call.1} parent=127 // pred_fallthru
          _
        // Predicated region
        $region133: #{tpu_custom_call.1} parent=127 // pred_check
          %p1269 = pneg %p345
        $region134: #{tpu_custom_call.1} parent=127 // pred_check_branch
          %1271 = sbr.rel (%p1269) target = $region136
        $region135: #{tpu_custom_call.1} parent=127 // pred_region
          %s1272 = sand.u32 %s330, 1
          %s1273 = sand.u32 %s330, 1
          %s1274 = smul.addr %s1273, 16
          %s1275 = scalar_lea.vmem [#allocation4], %s1274
        $region136: #{tpu_custom_call.1} parent=127 // pred_fallthru
          _
      $region128: #{tpu_custom_call.1} parent=5 // pred_fallthru
        _
    $region6: #{tpu_custom_call.1} parent=1 // loop_footer
      %s27 = sadd.s32 1, %s23
    $region7: #{tpu_custom_call.1} parent=1 // loop_footer_branch
      %22 = sbr.rel target = $region3
    $region8: #{tpu_custom_call.1} parent=1 // loop_exit
      _
    %1276 = vsyncpa [#allocation3], 1
    %s1277 = scalar_lea.sflag [#allocation3], 1
    %1278 = vsyncpa %s1277, 1

</llo_original>
